<compile_context>
chip_gen: v5e
topology: v5e:2x2
jax: 0.10.0
libtpu: 0.0.40
codegen_flags: <defaults>
</compile_context>

<pallas_src>
import functools

import jax
import jax.numpy as jnp
from jax.experimental import pallas as pl
from jax.experimental.pallas import tpu as pltpu

EPS = 1e-5  # PyTorch GroupNorm default


# ---------------------------------------------------------------------------
# Pallas kernel: full residual block for one batch block (Bt samples)
# ---------------------------------------------------------------------------
def residual_block_kernel(x_ref, emb_ref, mask_ref, seg_ref, seg_t_ref,
                          a1_ref, a1t_ref, gn1_g_ref, gn1_b_ref, w1_ref,
                          a2_ref, a2t_ref, gn2_g_ref, gn2_b_ref, w2_ref,
                          bias_ref, rw_ref, o_ref, *,
                          inv_count1, inv_count2, use_res_conv):
    f32 = jnp.float32
    x = x_ref[0].astype(f32)          # (Cin, P), per-sample zero-padded layout
    mask = mask_ref[...]              # (1, P)   1.0 at valid positions
    seg = seg_ref[...]                # (P, Bt)  segment membership (one-hot)
    seg_t = seg_t_ref[...]            # (Bt, P)

    def group_norm(h, a, a_t, gamma, beta, inv_count):
        # Two-stage reduction: lane-sum per sample via an MXU matmul with the
        # segment matrix, then group-combine with a tiny one-hot matmul.
        # (h is zero at all invalid lane positions, so sums are exact.)
        ssum = jnp.dot(h, seg, preferred_element_type=f32)         # (C, Bt)
        ssq = jnp.dot(h * h, seg, preferred_element_type=f32)      # (C, Bt)
        gsum = jnp.dot(a, ssum, preferred_element_type=f32)        # (G, Bt)
        gsq = jnp.dot(a, ssq, preferred_element_type=f32)          # (G, Bt)
        mean = gsum * inv_count
        var = gsq * inv_count - mean * mean
        inv_std = jax.lax.rsqrt(var + EPS)                         # (G, Bt)
        scale_cb = jnp.dot(a_t, inv_std, preferred_element_type=f32) * gamma
        mean_cb = jnp.dot(a_t, mean, preferred_element_type=f32)   # (C, Bt)
        shift_cb = beta - mean_cb * scale_cb                       # (C, Bt)
        scale = jnp.dot(scale_cb, seg_t, preferred_element_type=f32)  # (C, P)
        shift = jnp.dot(shift_cb, seg_t, preferred_element_type=f32)  # (C, P)
        return h * scale + shift

    def silu(h):
        return h * jax.nn.sigmoid(h)

    def conv3(h, w_cat):
        # im2col: stack the three tap-shifted copies along channels and run a
        # single MXU matmul with K = 3*C.  Roll wrap-around lands in per-sample
        # pad slots (discarded); in-segment boundary taps read zeros because h
        # is masked before every conv.
        # NOTE: jnp.roll lowers to lane slices+concat; pltpu.roll would keep
        # the shift on the XLU rotate slot.
        h3 = jnp.concatenate(
            [jnp.roll(h, 1, axis=1), h, jnp.roll(h, -1, axis=1)], axis=0)
        return jnp.dot(w_cat, h3, preferred_element_type=f32)      # (Cout, P)

    # --- inp_layers: GroupNorm -> SiLU -> Conv1d(k=3, pad=1) ---
    h = group_norm(x, a1_ref[...], a1t_ref[...],
                   gn1_g_ref[...], gn1_b_ref[...], inv_count1)
    h = silu(h) * mask
    h = conv3(h, w1_ref[...])

    # --- time embedding: already SiLU->Linear projected (conv1 bias folded in),
    #     just broadcast over the lane positions of each sample ---
    h = (h + jnp.dot(emb_ref[0], seg_t, preferred_element_type=f32)) * mask

    # --- out_layers: GroupNorm -> SiLU -> Dropout(0) -> Conv1d(k=3, pad=1) ---
    h = group_norm(h, a2_ref[...], a2t_ref[...],
                   gn2_g_ref[...], gn2_b_ref[...], inv_count2)
    h = silu(h) * mask
    h = conv3(h, w2_ref[...])

    # --- residual path: 1x1 conv when Cin != Cout, identity otherwise ---
    if use_res_conv:
        res = jnp.dot(rw_ref[...], x, preferred_element_type=f32)
    else:
        res = x
    o_ref[...] = (h + res + bias_ref[...])[None].astype(o_ref.dtype)


# ---------------------------------------------------------------------------
# Wrapper
# ---------------------------------------------------------------------------
def time_conditional_residual_block_1d(x, embed, params, n_groups=8,
                                       batch_block=8):
    N, Cin, L = x.shape
    Cout = params["conv1_w"].shape[0]
    assert Cin % n_groups == 0 and Cout % n_groups == 0, \
        "n_groups must divide both channel counts"
    use_res_conv = (Cin != Cout)   # PyTorch module uses Identity when equal

    f32 = jnp.float32
    Bt = min(batch_block, N)                   # samples folded per grid step
    Nb = -(-N // Bt)                           # number of batch blocks (grid)
    Npad = Nb * Bt
    Lseg = L + 2                               # one zero pad slot on each side
    P = ((Bt * Lseg + 127) // 128) * 128       # lane-dense width (mult of 128)

    xp = x.astype(f32)
    eb = embed.astype(f32)
    if Npad != N:
        xp = jnp.pad(xp, ((0, Npad - N), (0, 0), (0, 0)))
        eb = jnp.pad(eb, ((0, Npad - N), (0, 0)))

    # x -> (Nb, Cin, P): each sample occupies Lseg lanes, zeros at the segment
    # edges provide the conv's "same" zero padding per sample.
    xb = jnp.pad(xp.reshape(Nb, Bt, Cin, L), ((0, 0), (0, 0), (0, 0), (1, 1)))
    xb = jnp.transpose(xb, (0, 2, 1, 3)).reshape(Nb, Cin, Bt * Lseg)
    xb = jnp.pad(xb, ((0, 0), (0, 0), (0, P - Bt * Lseg)))

    # Time-embedding projection for all samples in plain JAX (one batched
    # matmul), with the conv1 bias folded in.
    emb_proj = (jax.nn.silu(eb) @ params["time_w"].astype(f32).T
                + params["time_b"].astype(f32) + params["conv1_b"].astype(f32))
    emb_t = jnp.transpose(emb_proj.reshape(Nb, Bt, Cout), (0, 2, 1))  # (Nb,Cout,Bt)

    # Lane mask / segment (position -> sample) matrices.
    pos = jnp.arange(P)
    seg_id, off = pos // Lseg, pos % Lseg
    valid = (seg_id < Bt) & (off >= 1) & (off <= L)
    mask = valid.astype(f32).reshape(1, P)
    seg = (seg_id[:, None] == jnp.arange(Bt)[None, :]).astype(f32)    # (P, Bt)
    seg_t = seg.T                                                     # (Bt, P)

    # One-hot group matrices for the GroupNorm group-combine / broadcast.
    def group_mats(C):
        gid = jnp.arange(C) // (C // n_groups)
        a = (gid[None, :] == jnp.arange(n_groups)[:, None]).astype(f32)
        return a, a.T
    a1, a1_t = group_mats(Cin)
    a2, a2_t = group_mats(Cout)

    # im2col conv weights: (Cout, 3*C), tap-major column blocks.
    w1 = jnp.transpose(params["conv1_w"].astype(f32), (0, 2, 1)).reshape(Cout, 3 * Cin)
    w2 = jnp.transpose(params["conv2_w"].astype(f32), (0, 2, 1)).reshape(Cout, 3 * Cout)

    gn1_g = params["gn1_gamma"].astype(f32).reshape(Cin, 1)
    gn1_b = params["gn1_beta"].astype(f32).reshape(Cin, 1)
    gn2_g = params["gn2_gamma"].astype(f32).reshape(Cout, 1)
    gn2_b = params["gn2_beta"].astype(f32).reshape(Cout, 1)

    bias_col = params["conv2_b"].astype(f32)
    if use_res_conv:
        bias_col = bias_col + params["res_b"].astype(f32)
        r_w = params["res_w"].astype(f32)[:, :, 0]                    # (Cout,Cin)
    else:
        r_w = jnp.zeros((Cout, Cin), f32)                             # unused
    bias_col = bias_col.reshape(Cout, 1)

    inv_count1 = 1.0 / float((Cin // n_groups) * L)
    inv_count2 = 1.0 / float((Cout // n_groups) * L)

    full = lambda a: pl.BlockSpec(a.shape, lambda i: (0,) * a.ndim)
    kernel = functools.partial(residual_block_kernel,
                               inv_count1=inv_count1, inv_count2=inv_count2,
                               use_res_conv=use_res_conv)

    out_pad = pl.pallas_call(
        kernel,
        out_shape=jax.ShapeDtypeStruct((Nb, Cout, P), f32),
        grid_spec=pltpu.PrefetchScalarGridSpec(
            num_scalar_prefetch=0,
            grid=(Nb,),
            in_specs=[
                pl.BlockSpec((1, Cin, P), lambda i: (i, 0, 0)),    # x block
                pl.BlockSpec((1, Cout, Bt), lambda i: (i, 0, 0)),  # emb block
                full(mask), full(seg), full(seg_t),
                full(a1), full(a1_t), full(gn1_g), full(gn1_b), full(w1),
                full(a2), full(a2_t), full(gn2_g), full(gn2_b), full(w2),
                full(bias_col), full(r_w),
            ],
            out_specs=pl.BlockSpec((1, Cout, P), lambda i: (i, 0, 0)),
        ),
        compiler_params=pltpu.CompilerParams(
            dimension_semantics=("parallel",)),
    )(xb, emb_t, mask, seg, seg_t, a1, a1_t, gn1_g, gn1_b, w1,
      a2, a2_t, gn2_g, gn2_b, w2, bias_col, r_w)

    # Extract valid positions: (Nb, Cout, P) -> (N, Cout, L)
    out = out_pad[:, :, :Bt * Lseg].reshape(Nb, Cout, Bt, Lseg)
    out = jnp.transpose(out, (0, 2, 1, 3)).reshape(Npad, Cout, Lseg)[:, :, 1:1 + L]
    return out[:N].astype(x.dtype)


# ---------------------------------------------------------------------------
# Pure-JAX reference (mirrors the PyTorch forward) for correctness checking
# ---------------------------------------------------------------------------
def _ref_group_norm(x, gamma, beta, n_groups, eps=EPS):
    N, C, L = x.shape
    xg = x.reshape(N, n_groups, -1)
    mean = xg.mean(-1, keepdims=True)
    var = ((xg - mean) ** 2).mean(-1, keepdims=True)
    xn = ((xg - mean) / jnp.sqrt(var + eps)).reshape(N, C, L)
    return xn * gamma[None, :, None] + beta[None, :, None]


def _ref_conv1d(x, w, b, pad):
    K = w.shape[-1]
    L = x.shape[-1]
    xp = jnp.pad(x, ((0, 0), (0, 0), (pad, pad)))
    out = sum(jnp.einsum('oi,nil->nol', w[:, :, k], xp[:, :, k:k + L])
              for k in range(K))
    return out + b[None, :, None]


def reference_forward(x, embed, p, n_groups=8):
    h = _ref_group_norm(x, p["gn1_gamma"], p["gn1_beta"], n_groups)
    h = jax.nn.silu(h)
    h = _ref_conv1d(h, p["conv1_w"], p["conv1_b"], pad=1)
    emb_out = jax.nn.silu(embed) @ p["time_w"].T + p["time_b"]
    h = h + emb_out[:, :, None]
    h = _ref_group_norm(h, p["gn2_gamma"], p["gn2_beta"], n_groups)
    h = jax.nn.silu(h)
    h = _ref_conv1d(h, p["conv2_w"], p["conv2_b"], pad=1)
    res = _ref_conv1d(x, p["res_w"], p["res_b"], pad=0)
    return res + h


# ---------------------------------------------------------------------------
if __name__ == "__main__":
    N, Cin, Cout, L, E, G = 2, 16, 32, 16, 32, 8

    key = jax.random.PRNGKey(0)
    ks = jax.random.split(key, 16)

    params = {
        "gn1_gamma": 1.0 + 0.1 * jax.random.normal(ks[0], (Cin,), jnp.float32),
        "gn1_beta": 0.1 * jax.random.normal(ks[1], (Cin,), jnp.float32),
        "conv1_w": 0.1 * jax.random.normal(ks[2], (Cout, Cin, 3), jnp.float32),
        "conv1_b": 0.1 * jax.random.normal(ks[3], (Cout,), jnp.float32),
        "time_w": 0.1 * jax.random.normal(ks[4], (Cout, E), jnp.float32),
        "time_b": 0.1 * jax.random.normal(ks[5], (Cout,), jnp.float32),
        "gn2_gamma": 1.0 + 0.1 * jax.random.normal(ks[6], (Cout,), jnp.float32),
        "gn2_beta": 0.1 * jax.random.normal(ks[7], (Cout,), jnp.float32),
        "conv2_w": 0.1 * jax.random.normal(ks[8], (Cout, Cout, 3), jnp.float32),
        "conv2_b": 0.1 * jax.random.normal(ks[9], (Cout,), jnp.float32),
        # residual path: inp != out channels, use_conv=False -> Conv1d kernel 1
        "res_w": 0.1 * jax.random.normal(ks[10], (Cout, Cin, 1), jnp.float32),
        "res_b": 0.1 * jax.random.normal(ks[11], (Cout,), jnp.float32),
    }

    x = jax.random.normal(ks[12], (N, Cin, L), jnp.float32)
    embed = jax.random.normal(ks[13], (N, E), jnp.float32)

    out = time_conditional_residual_block_1d(x, embed, params, n_groups=G)
    out = jax.block_until_ready(out)

    ref = reference_forward(x, embed, params, n_groups=G)
    assert out.shape == (N, Cout, L)
    assert jnp.allclose(out, ref, atol=2e-4, rtol=2e-4), (
        float(jnp.max(jnp.abs(out - ref))))

    print("KERNEL_OK")
</pallas_src>

<mosaic_0001>
module attributes {stable_mosaic.version = 11 : i64} {
  func.func @residual_block_kernel(%arg0: i32, %arg1: memref<1x16x128xf32, #tpu.memory_space<vmem>>, %arg2: memref<1x32x2xf32, #tpu.memory_space<vmem>>, %arg3: memref<1x128xf32, #tpu.memory_space<vmem>>, %arg4: memref<128x2xf32, #tpu.memory_space<vmem>>, %arg5: memref<2x128xf32, #tpu.memory_space<vmem>>, %arg6: memref<8x16xf32, #tpu.memory_space<vmem>>, %arg7: memref<16x8xf32, #tpu.memory_space<vmem>>, %arg8: memref<16x1xf32, #tpu.memory_space<vmem>>, %arg9: memref<16x1xf32, #tpu.memory_space<vmem>>, %arg10: memref<32x48xf32, #tpu.memory_space<vmem>>, %arg11: memref<8x32xf32, #tpu.memory_space<vmem>>, %arg12: memref<32x8xf32, #tpu.memory_space<vmem>>, %arg13: memref<32x1xf32, #tpu.memory_space<vmem>>, %arg14: memref<32x1xf32, #tpu.memory_space<vmem>>, %arg15: memref<32x96xf32, #tpu.memory_space<vmem>>, %arg16: memref<32x1xf32, #tpu.memory_space<vmem>>, %arg17: memref<32x16xf32, #tpu.memory_space<vmem>>, %arg18: memref<1x32x128xf32, #tpu.memory_space<vmem>>) attributes {dimension_semantics = [#tpu.dimension_semantics<parallel>], iteration_bounds = array<i64: 1>, scalar_prefetch = 0 : i64, scratch_operands = 0 : i64, tpu.core_type = #tpu.core_type<tc>, window_params = [{transform_indices = @transform_0, window_bounds = array<i64: 1, 16, 128>}, {transform_indices = @transform_1, window_bounds = array<i64: 1, 32, 2>}, {pipeline_mode = #tpu.pipeline_mode<synchronous>, transform_indices = @transform_2, window_bounds = array<i64: 1, 128>}, {pipeline_mode = #tpu.pipeline_mode<synchronous>, transform_indices = @transform_3, window_bounds = array<i64: 128, 2>}, {pipeline_mode = #tpu.pipeline_mode<synchronous>, transform_indices = @transform_4, window_bounds = array<i64: 2, 128>}, {pipeline_mode = #tpu.pipeline_mode<synchronous>, transform_indices = @transform_5, window_bounds = array<i64: 8, 16>}, {pipeline_mode = #tpu.pipeline_mode<synchronous>, transform_indices = @transform_6, window_bounds = array<i64: 16, 8>}, {pipeline_mode = #tpu.pipeline_mode<synchronous>, transform_indices = @transform_7, window_bounds = array<i64: 16, 1>}, {pipeline_mode = #tpu.pipeline_mode<synchronous>, transform_indices = @transform_8, window_bounds = array<i64: 16, 1>}, {pipeline_mode = #tpu.pipeline_mode<synchronous>, transform_indices = @transform_9, window_bounds = array<i64: 32, 48>}, {pipeline_mode = #tpu.pipeline_mode<synchronous>, transform_indices = @transform_10, window_bounds = array<i64: 8, 32>}, {pipeline_mode = #tpu.pipeline_mode<synchronous>, transform_indices = @transform_11, window_bounds = array<i64: 32, 8>}, {pipeline_mode = #tpu.pipeline_mode<synchronous>, transform_indices = @transform_12, window_bounds = array<i64: 32, 1>}, {pipeline_mode = #tpu.pipeline_mode<synchronous>, transform_indices = @transform_13, window_bounds = array<i64: 32, 1>}, {pipeline_mode = #tpu.pipeline_mode<synchronous>, transform_indices = @transform_14, window_bounds = array<i64: 32, 96>}, {pipeline_mode = #tpu.pipeline_mode<synchronous>, transform_indices = @transform_15, window_bounds = array<i64: 32, 1>}, {pipeline_mode = #tpu.pipeline_mode<synchronous>, transform_indices = @transform_16, window_bounds = array<i64: 32, 16>}, {transform_indices = @transform_17, window_bounds = array<i64: 1, 32, 128>}]} {
    %c0 = arith.constant 0 : index
    %c0_0 = arith.constant 0 : index
    %c0_1 = arith.constant 0 : index
    %0 = vector.load %arg1[%c0, %c0_0, %c0_1] : memref<1x16x128xf32, #tpu.memory_space<vmem>>, vector<1x16x128xf32>
    %1 = vector.shape_cast %0 : vector<1x16x128xf32> to vector<16x128xf32>
    %c0_2 = arith.constant 0 : index
    %c0_3 = arith.constant 0 : index
    %2 = vector.load %arg3[%c0_2, %c0_3] : memref<1x128xf32, #tpu.memory_space<vmem>>, vector<1x128xf32>
    %c0_4 = arith.constant 0 : index
    %c0_5 = arith.constant 0 : index
    %3 = vector.load %arg4[%c0_4, %c0_5] : memref<128x2xf32, #tpu.memory_space<vmem>>, vector<128x2xf32>
    %c0_6 = arith.constant 0 : index
    %c0_7 = arith.constant 0 : index
    %4 = vector.load %arg5[%c0_6, %c0_7] : memref<2x128xf32, #tpu.memory_space<vmem>>, vector<2x128xf32>
    %c0_8 = arith.constant 0 : index
    %c0_9 = arith.constant 0 : index
    %5 = vector.load %arg6[%c0_8, %c0_9] : memref<8x16xf32, #tpu.memory_space<vmem>>, vector<8x16xf32>
    %c0_10 = arith.constant 0 : index
    %c0_11 = arith.constant 0 : index
    %6 = vector.load %arg7[%c0_10, %c0_11] : memref<16x8xf32, #tpu.memory_space<vmem>>, vector<16x8xf32>
    %c0_12 = arith.constant 0 : index
    %c0_13 = arith.constant 0 : index
    %7 = vector.load %arg8[%c0_12, %c0_13] : memref<16x1xf32, #tpu.memory_space<vmem>>, vector<16x1xf32>
    %c0_14 = arith.constant 0 : index
    %c0_15 = arith.constant 0 : index
    %8 = vector.load %arg9[%c0_14, %c0_15] : memref<16x1xf32, #tpu.memory_space<vmem>>, vector<16x1xf32>
    %cst = arith.constant dense<0.000000e+00> : vector<16x2xf32>
    %9 = tpu.matmul %1, %3, %cst {dimension_numbers = #tpu.dot_dimension_numbers<[1], [0], [0], [1], [0, 0, 1, 1], [], []>} : vector<16x128xf32>, vector<128x2xf32>, vector<16x2xf32> -> vector<16x2xf32>
    %10 = arith.mulf %1, %1 : vector<16x128xf32>
    %cst_16 = arith.constant dense<0.000000e+00> : vector<16x2xf32>
    %11 = tpu.matmul %10, %3, %cst_16 {dimension_numbers = #tpu.dot_dimension_numbers<[1], [0], [0], [1], [0, 0, 1, 1], [], []>} : vector<16x128xf32>, vector<128x2xf32>, vector<16x2xf32> -> vector<16x2xf32>
    %cst_17 = arith.constant dense<0.000000e+00> : vector<8x2xf32>
    %12 = tpu.matmul %5, %9, %cst_17 {dimension_numbers = #tpu.dot_dimension_numbers<[1], [0], [0], [1], [0, 0, 1, 1], [], []>} : vector<8x16xf32>, vector<16x2xf32>, vector<8x2xf32> -> vector<8x2xf32>
    %cst_18 = arith.constant dense<0.000000e+00> : vector<8x2xf32>
    %13 = tpu.matmul %5, %11, %cst_18 {dimension_numbers = #tpu.dot_dimension_numbers<[1], [0], [0], [1], [0, 0, 1, 1], [], []>} : vector<8x16xf32>, vector<16x2xf32>, vector<8x2xf32> -> vector<8x2xf32>
    %cst_19 = arith.constant 3.125000e-02 : f32
    %14 = vector.broadcast %cst_19 : f32 to vector<8x2xf32>
    %15 = arith.mulf %12, %14 : vector<8x2xf32>
    %cst_20 = arith.constant 3.125000e-02 : f32
    %16 = vector.broadcast %cst_20 : f32 to vector<8x2xf32>
    %17 = arith.mulf %13, %16 : vector<8x2xf32>
    %18 = arith.mulf %15, %15 : vector<8x2xf32>
    %19 = arith.subf %17, %18 : vector<8x2xf32>
    %cst_21 = arith.constant 9.99999974E-6 : f32
    %20 = vector.broadcast %cst_21 : f32 to vector<8x2xf32>
    %21 = arith.addf %19, %20 : vector<8x2xf32>
    %22 = math.rsqrt %21 : vector<8x2xf32>
    %cst_22 = arith.constant dense<0.000000e+00> : vector<16x2xf32>
    %23 = tpu.matmul %6, %22, %cst_22 {dimension_numbers = #tpu.dot_dimension_numbers<[1], [0], [0], [1], [0, 0, 1, 1], [], []>} : vector<16x8xf32>, vector<8x2xf32>, vector<16x2xf32> -> vector<16x2xf32>
    %24 = vector.broadcast %7 : vector<16x1xf32> to vector<16x2xf32>
    %25 = arith.mulf %23, %24 : vector<16x2xf32>
    %cst_23 = arith.constant dense<0.000000e+00> : vector<16x2xf32>
    %26 = tpu.matmul %6, %15, %cst_23 {dimension_numbers = #tpu.dot_dimension_numbers<[1], [0], [0], [1], [0, 0, 1, 1], [], []>} : vector<16x8xf32>, vector<8x2xf32>, vector<16x2xf32> -> vector<16x2xf32>
    %27 = arith.mulf %26, %25 : vector<16x2xf32>
    %28 = vector.broadcast %8 : vector<16x1xf32> to vector<16x2xf32>
    %29 = arith.subf %28, %27 : vector<16x2xf32>
    %cst_24 = arith.constant dense<0.000000e+00> : vector<16x128xf32>
    %30 = tpu.matmul %25, %4, %cst_24 {dimension_numbers = #tpu.dot_dimension_numbers<[1], [0], [0], [1], [0, 0, 1, 1], [], []>} : vector<16x2xf32>, vector<2x128xf32>, vector<16x128xf32> -> vector<16x128xf32>
    %cst_25 = arith.constant dense<0.000000e+00> : vector<16x128xf32>
    %31 = tpu.matmul %29, %4, %cst_25 {dimension_numbers = #tpu.dot_dimension_numbers<[1], [0], [0], [1], [0, 0, 1, 1], [], []>} : vector<16x2xf32>, vector<2x128xf32>, vector<16x128xf32> -> vector<16x128xf32>
    %32 = arith.mulf %1, %30 : vector<16x128xf32>
    %33 = arith.addf %32, %31 : vector<16x128xf32>
    %34 = arith.negf %33 : vector<16x128xf32>
    %35 = math.exp %34 : vector<16x128xf32>
    %cst_26 = arith.constant 1.000000e+00 : f32
    %36 = vector.broadcast %cst_26 : f32 to vector<16x128xf32>
    %37 = arith.addf %36, %35 : vector<16x128xf32>
    %38 = arith.divf %36, %37 : vector<16x128xf32>
    %39 = arith.mulf %33, %38 : vector<16x128xf32>
    %40 = vector.broadcast %2 : vector<1x128xf32> to vector<16x128xf32>
    %41 = arith.mulf %39, %40 : vector<16x128xf32>
    %c0_27 = arith.constant 0 : index
    %c0_28 = arith.constant 0 : index
    %42 = vector.load %arg10[%c0_27, %c0_28] : memref<32x48xf32, #tpu.memory_space<vmem>>, vector<32x48xf32>
    %43 = vector.extract_strided_slice %41 {offsets = [0, 127], sizes = [16, 1], strides = [1, 1]} : vector<16x128xf32> to vector<16x1xf32>
    %44 = vector.extract_strided_slice %41 {offsets = [0, 0], sizes = [16, 127], strides = [1, 1]} : vector<16x128xf32> to vector<16x127xf32>
    %45 = tpu.concatenate %43, %44 in 1 : vector<16x1xf32>, vector<16x127xf32> -> vector<16x128xf32>
    %46 = vector.extract_strided_slice %41 {offsets = [0, 1], sizes = [16, 127], strides = [1, 1]} : vector<16x128xf32> to vector<16x127xf32>
    %47 = vector.extract_strided_slice %41 {offsets = [0, 0], sizes = [16, 1], strides = [1, 1]} : vector<16x128xf32> to vector<16x1xf32>
    %48 = tpu.concatenate %46, %47 in 1 : vector<16x127xf32>, vector<16x1xf32> -> vector<16x128xf32>
    %49 = tpu.concatenate %45, %41, %48 in 0 : vector<16x128xf32>, vector<16x128xf32>, vector<16x128xf32> -> vector<48x128xf32>
    %cst_29 = arith.constant dense<0.000000e+00> : vector<32x128xf32>
    %50 = tpu.matmul %42, %49, %cst_29 {dimension_numbers = #tpu.dot_dimension_numbers<[1], [0], [0], [1], [0, 0, 1, 1], [], []>} : vector<32x48xf32>, vector<48x128xf32>, vector<32x128xf32> -> vector<32x128xf32>
    %c0_30 = arith.constant 0 : index
    %c0_31 = arith.constant 0 : index
    %c0_32 = arith.constant 0 : index
    %51 = vector.load %arg2[%c0_30, %c0_31, %c0_32] : memref<1x32x2xf32, #tpu.memory_space<vmem>>, vector<1x32x2xf32>
    %52 = vector.shape_cast %51 : vector<1x32x2xf32> to vector<32x2xf32>
    %cst_33 = arith.constant dense<0.000000e+00> : vector<32x128xf32>
    %53 = tpu.matmul %52, %4, %cst_33 {dimension_numbers = #tpu.dot_dimension_numbers<[1], [0], [0], [1], [0, 0, 1, 1], [], []>} : vector<32x2xf32>, vector<2x128xf32>, vector<32x128xf32> -> vector<32x128xf32>
    %54 = arith.addf %50, %53 : vector<32x128xf32>
    %55 = vector.broadcast %2 : vector<1x128xf32> to vector<32x128xf32>
    %56 = arith.mulf %54, %55 : vector<32x128xf32>
    %c0_34 = arith.constant 0 : index
    %c0_35 = arith.constant 0 : index
    %57 = vector.load %arg11[%c0_34, %c0_35] : memref<8x32xf32, #tpu.memory_space<vmem>>, vector<8x32xf32>
    %c0_36 = arith.constant 0 : index
    %c0_37 = arith.constant 0 : index
    %58 = vector.load %arg12[%c0_36, %c0_37] : memref<32x8xf32, #tpu.memory_space<vmem>>, vector<32x8xf32>
    %c0_38 = arith.constant 0 : index
    %c0_39 = arith.constant 0 : index
    %59 = vector.load %arg13[%c0_38, %c0_39] : memref<32x1xf32, #tpu.memory_space<vmem>>, vector<32x1xf32>
    %c0_40 = arith.constant 0 : index
    %c0_41 = arith.constant 0 : index
    %60 = vector.load %arg14[%c0_40, %c0_41] : memref<32x1xf32, #tpu.memory_space<vmem>>, vector<32x1xf32>
    %cst_42 = arith.constant dense<0.000000e+00> : vector<32x2xf32>
    %61 = tpu.matmul %56, %3, %cst_42 {dimension_numbers = #tpu.dot_dimension_numbers<[1], [0], [0], [1], [0, 0, 1, 1], [], []>} : vector<32x128xf32>, vector<128x2xf32>, vector<32x2xf32> -> vector<32x2xf32>
    %62 = arith.mulf %56, %56 : vector<32x128xf32>
    %cst_43 = arith.constant dense<0.000000e+00> : vector<32x2xf32>
    %63 = tpu.matmul %62, %3, %cst_43 {dimension_numbers = #tpu.dot_dimension_numbers<[1], [0], [0], [1], [0, 0, 1, 1], [], []>} : vector<32x128xf32>, vector<128x2xf32>, vector<32x2xf32> -> vector<32x2xf32>
    %cst_44 = arith.constant dense<0.000000e+00> : vector<8x2xf32>
    %64 = tpu.matmul %57, %61, %cst_44 {dimension_numbers = #tpu.dot_dimension_numbers<[1], [0], [0], [1], [0, 0, 1, 1], [], []>} : vector<8x32xf32>, vector<32x2xf32>, vector<8x2xf32> -> vector<8x2xf32>
    %cst_45 = arith.constant dense<0.000000e+00> : vector<8x2xf32>
    %65 = tpu.matmul %57, %63, %cst_45 {dimension_numbers = #tpu.dot_dimension_numbers<[1], [0], [0], [1], [0, 0, 1, 1], [], []>} : vector<8x32xf32>, vector<32x2xf32>, vector<8x2xf32> -> vector<8x2xf32>
    %cst_46 = arith.constant 1.562500e-02 : f32
    %66 = vector.broadcast %cst_46 : f32 to vector<8x2xf32>
    %67 = arith.mulf %64, %66 : vector<8x2xf32>
    %cst_47 = arith.constant 1.562500e-02 : f32
    %68 = vector.broadcast %cst_47 : f32 to vector<8x2xf32>
    %69 = arith.mulf %65, %68 : vector<8x2xf32>
    %70 = arith.mulf %67, %67 : vector<8x2xf32>
    %71 = arith.subf %69, %70 : vector<8x2xf32>
    %cst_48 = arith.constant 9.99999974E-6 : f32
    %72 = vector.broadcast %cst_48 : f32 to vector<8x2xf32>
    %73 = arith.addf %71, %72 : vector<8x2xf32>
    %74 = math.rsqrt %73 : vector<8x2xf32>
    %cst_49 = arith.constant dense<0.000000e+00> : vector<32x2xf32>
    %75 = tpu.matmul %58, %74, %cst_49 {dimension_numbers = #tpu.dot_dimension_numbers<[1], [0], [0], [1], [0, 0, 1, 1], [], []>} : vector<32x8xf32>, vector<8x2xf32>, vector<32x2xf32> -> vector<32x2xf32>
    %76 = vector.broadcast %59 : vector<32x1xf32> to vector<32x2xf32>
    %77 = arith.mulf %75, %76 : vector<32x2xf32>
    %cst_50 = arith.constant dense<0.000000e+00> : vector<32x2xf32>
    %78 = tpu.matmul %58, %67, %cst_50 {dimension_numbers = #tpu.dot_dimension_numbers<[1], [0], [0], [1], [0, 0, 1, 1], [], []>} : vector<32x8xf32>, vector<8x2xf32>, vector<32x2xf32> -> vector<32x2xf32>
    %79 = arith.mulf %78, %77 : vector<32x2xf32>
    %80 = vector.broadcast %60 : vector<32x1xf32> to vector<32x2xf32>
    %81 = arith.subf %80, %79 : vector<32x2xf32>
    %cst_51 = arith.constant dense<0.000000e+00> : vector<32x128xf32>
    %82 = tpu.matmul %77, %4, %cst_51 {dimension_numbers = #tpu.dot_dimension_numbers<[1], [0], [0], [1], [0, 0, 1, 1], [], []>} : vector<32x2xf32>, vector<2x128xf32>, vector<32x128xf32> -> vector<32x128xf32>
    %cst_52 = arith.constant dense<0.000000e+00> : vector<32x128xf32>
    %83 = tpu.matmul %81, %4, %cst_52 {dimension_numbers = #tpu.dot_dimension_numbers<[1], [0], [0], [1], [0, 0, 1, 1], [], []>} : vector<32x2xf32>, vector<2x128xf32>, vector<32x128xf32> -> vector<32x128xf32>
    %84 = arith.mulf %56, %82 : vector<32x128xf32>
    %85 = arith.addf %84, %83 : vector<32x128xf32>
    %86 = arith.negf %85 : vector<32x128xf32>
    %87 = math.exp %86 : vector<32x128xf32>
    %cst_53 = arith.constant 1.000000e+00 : f32
    %88 = vector.broadcast %cst_53 : f32 to vector<32x128xf32>
    %89 = arith.addf %88, %87 : vector<32x128xf32>
    %90 = arith.divf %88, %89 : vector<32x128xf32>
    %91 = arith.mulf %85, %90 : vector<32x128xf32>
    %92 = vector.broadcast %2 : vector<1x128xf32> to vector<32x128xf32>
    %93 = arith.mulf %91, %92 : vector<32x128xf32>
    %c0_54 = arith.constant 0 : index
    %c0_55 = arith.constant 0 : index
    %94 = vector.load %arg15[%c0_54, %c0_55] : memref<32x96xf32, #tpu.memory_space<vmem>>, vector<32x96xf32>
    %95 = vector.extract_strided_slice %93 {offsets = [0, 127], sizes = [32, 1], strides = [1, 1]} : vector<32x128xf32> to vector<32x1xf32>
    %96 = vector.extract_strided_slice %93 {offsets = [0, 0], sizes = [32, 127], strides = [1, 1]} : vector<32x128xf32> to vector<32x127xf32>
    %97 = tpu.concatenate %95, %96 in 1 : vector<32x1xf32>, vector<32x127xf32> -> vector<32x128xf32>
    %98 = vector.extract_strided_slice %93 {offsets = [0, 1], sizes = [32, 127], strides = [1, 1]} : vector<32x128xf32> to vector<32x127xf32>
    %99 = vector.extract_strided_slice %93 {offsets = [0, 0], sizes = [32, 1], strides = [1, 1]} : vector<32x128xf32> to vector<32x1xf32>
    %100 = tpu.concatenate %98, %99 in 1 : vector<32x127xf32>, vector<32x1xf32> -> vector<32x128xf32>
    %101 = tpu.concatenate %97, %93, %100 in 0 : vector<32x128xf32>, vector<32x128xf32>, vector<32x128xf32> -> vector<96x128xf32>
    %cst_56 = arith.constant dense<0.000000e+00> : vector<32x128xf32>
    %102 = tpu.matmul %94, %101, %cst_56 {dimension_numbers = #tpu.dot_dimension_numbers<[1], [0], [0], [1], [0, 0, 1, 1], [], []>} : vector<32x96xf32>, vector<96x128xf32>, vector<32x128xf32> -> vector<32x128xf32>
    %c0_57 = arith.constant 0 : index
    %c0_58 = arith.constant 0 : index
    %103 = vector.load %arg17[%c0_57, %c0_58] : memref<32x16xf32, #tpu.memory_space<vmem>>, vector<32x16xf32>
    %cst_59 = arith.constant dense<0.000000e+00> : vector<32x128xf32>
    %104 = tpu.matmul %103, %1, %cst_59 {dimension_numbers = #tpu.dot_dimension_numbers<[1], [0], [0], [1], [0, 0, 1, 1], [], []>} : vector<32x16xf32>, vector<16x128xf32>, vector<32x128xf32> -> vector<32x128xf32>
    %105 = arith.addf %102, %104 : vector<32x128xf32>
    %c0_60 = arith.constant 0 : index
    %c0_61 = arith.constant 0 : index
    %106 = vector.load %arg16[%c0_60, %c0_61] : memref<32x1xf32, #tpu.memory_space<vmem>>, vector<32x1xf32>
    %107 = vector.broadcast %106 : vector<32x1xf32> to vector<32x128xf32>
    %108 = arith.addf %105, %107 : vector<32x128xf32>
    %109 = vector.shape_cast %108 : vector<32x128xf32> to vector<1x32x128xf32>
    %c0_62 = arith.constant 0 : index
    %c0_63 = arith.constant 0 : index
    %c0_64 = arith.constant 0 : index
    %110 = vector.load %arg18[%c0_62, %c0_63, %c0_64] : memref<1x32x128xf32, #tpu.memory_space<vmem>>, vector<1x32x128xf32>
    tpu.vector_store %arg18[%c0_62, %c0_63, %c0_64], %109 {strides = array<i32>} : memref<1x32x128xf32, #tpu.memory_space<vmem>>, vector<1x32x128xf32>,
    return
  }
  func.func @transform_0(%arg0: i32) -> (i32, i32, i32) {
    %c0_i32 = arith.constant 0 : i32
    %c0_i32_0 = arith.constant 0 : i32
    %c0_i32_1 = arith.constant 0 : i32
    return %arg0, %c0_i32, %c0_i32_0 : i32, i32, i32
  }
  func.func @transform_1(%arg0: i32) -> (i32, i32, i32) {
    %c0_i32 = arith.constant 0 : i32
    %c0_i32_0 = arith.constant 0 : i32
    %c0_i32_1 = arith.constant 0 : i32
    return %arg0, %c0_i32, %c0_i32_0 : i32, i32, i32
  }
  func.func @transform_2(%arg0: i32) -> (i32, i32) {
    %c0_i32 = arith.constant 0 : i32
    %c0_i32_0 = arith.constant 0 : i32
    %c0_i32_1 = arith.constant 0 : i32
    return %c0_i32, %c0_i32_0 : i32, i32
  }
  func.func @transform_3(%arg0: i32) -> (i32, i32) {
    %c0_i32 = arith.constant 0 : i32
    %c0_i32_0 = arith.constant 0 : i32
    %c0_i32_1 = arith.constant 0 : i32
    return %c0_i32, %c0_i32_0 : i32, i32
  }
  func.func @transform_4(%arg0: i32) -> (i32, i32) {
    %c0_i32 = arith.constant 0 : i32
    %c0_i32_0 = arith.constant 0 : i32
    %c0_i32_1 = arith.constant 0 : i32
    return %c0_i32, %c0_i32_0 : i32, i32
  }
  func.func @transform_5(%arg0: i32) -> (i32, i32) {
    %c0_i32 = arith.constant 0 : i32
    %c0_i32_0 = arith.constant 0 : i32
    %c0_i32_1 = arith.constant 0 : i32
    return %c0_i32, %c0_i32_0 : i32, i32
  }
  func.func @transform_6(%arg0: i32) -> (i32, i32) {
    %c0_i32 = arith.constant 0 : i32
    %c0_i32_0 = arith.constant 0 : i32
    %c0_i32_1 = arith.constant 0 : i32
    return %c0_i32, %c0_i32_0 : i32, i32
  }
  func.func @transform_7(%arg0: i32) -> (i32, i32) {
    %c0_i32 = arith.constant 0 : i32
    %c0_i32_0 = arith.constant 0 : i32
    %c0_i32_1 = arith.constant 0 : i32
    return %c0_i32, %c0_i32_0 : i32, i32
  }
  func.func @transform_8(%arg0: i32) -> (i32, i32) {
    %c0_i32 = arith.constant 0 : i32
    %c0_i32_0 = arith.constant 0 : i32
    %c0_i32_1 = arith.constant 0 : i32
    return %c0_i32, %c0_i32_0 : i32, i32
  }
  func.func @transform_9(%arg0: i32) -> (i32, i32) {
    %c0_i32 = arith.constant 0 : i32
    %c0_i32_0 = arith.constant 0 : i32
    %c0_i32_1 = arith.constant 0 : i32
    return %c0_i32, %c0_i32_0 : i32, i32
  }
  func.func @transform_10(%arg0: i32) -> (i32, i32) {
    %c0_i32 = arith.constant 0 : i32
    %c0_i32_0 = arith.constant 0 : i32
    %c0_i32_1 = arith.constant 0 : i32
    return %c0_i32, %c0_i32_0 : i32, i32
  }
  func.func @transform_11(%arg0: i32) -> (i32, i32) {
    %c0_i32 = arith.constant 0 : i32
    %c0_i32_0 = arith.constant 0 : i32
    %c0_i32_1 = arith.constant 0 : i32
    return %c0_i32, %c0_i32_0 : i32, i32
  }
  func.func @transform_12(%arg0: i32) -> (i32, i32) {
    %c0_i32 = arith.constant 0 : i32
    %c0_i32_0 = arith.constant 0 : i32
    %c0_i32_1 = arith.constant 0 : i32
    return %c0_i32, %c0_i32_0 : i32, i32
  }
  func.func @transform_13(%arg0: i32) -> (i32, i32) {
    %c0_i32 = arith.constant 0 : i32
    %c0_i32_0 = arith.constant 0 : i32
    %c0_i32_1 = arith.constant 0 : i32
    return %c0_i32, %c0_i32_0 : i32, i32
  }
  func.func @transform_14(%arg0: i32) -> (i32, i32) {
    %c0_i32 = arith.constant 0 : i32
    %c0_i32_0 = arith.constant 0 : i32
    %c0_i32_1 = arith.constant 0 : i32
    return %c0_i32, %c0_i32_0 : i32, i32
  }
  func.func @transform_15(%arg0: i32) -> (i32, i32) {
    %c0_i32 = arith.constant 0 : i32
    %c0_i32_0 = arith.constant 0 : i32
    %c0_i32_1 = arith.constant 0 : i32
    return %c0_i32, %c0_i32_0 : i32, i32
  }
  func.func @transform_16(%arg0: i32) -> (i32, i32) {
    %c0_i32 = arith.constant 0 : i32
    %c0_i32_0 = arith.constant 0 : i32
    %c0_i32_1 = arith.constant 0 : i32
    return %c0_i32, %c0_i32_0 : i32, i32
  }
  func.func @transform_17(%arg0: i32) -> (i32, i32, i32) {
    %c0_i32 = arith.constant 0 : i32
    %c0_i32_0 = arith.constant 0 : i32
    %c0_i32_1 = arith.constant 0 : i32
    return %arg0, %c0_i32, %c0_i32_0 : i32, i32, i32
  }
}

</mosaic_0001>

<llo_original>
// kernel: tpu_custom_call.1
$region0: #{tpu_custom_call.1}
  #allocation0 [shape = 'u32[]', space=smem, size = 0x4, offset = 0x4, fixed_abs, tag = 'smem constant byte address 0x4 - core index']
  #allocation1 [shape = 'u32[72,128]{1,0:T(1,128)}', space=vmem, size = 0x9000, scoped, tag = 'internal scratch']
  %s0 = inlined_call_operand.vmem [shape: f32[1,16,128], index: 0, kind: input, shape index: {}]
  %s1 = inlined_call_operand.vmem [shape: f32[1,32,2], index: 1, kind: input, shape index: {}]
  %s2 = inlined_call_operand.vmem [shape: f32[1,128], index: 2, kind: input, shape index: {}]
  %s3 = inlined_call_operand.vmem [shape: f32[128,2], index: 3, kind: input, shape index: {}]
  %s4 = inlined_call_operand.vmem [shape: f32[2,128], index: 4, kind: input, shape index: {}]
  %s5 = inlined_call_operand.vmem [shape: f32[8,16], index: 5, kind: input, shape index: {}]
  %s6 = inlined_call_operand.vmem [shape: f32[16,8], index: 6, kind: input, shape index: {}]
  %s7 = inlined_call_operand.vmem [shape: f32[16,1], index: 7, kind: input, shape index: {}]
  %s8 = inlined_call_operand.vmem [shape: f32[16,1], index: 8, kind: input, shape index: {}]
  %s9 = inlined_call_operand.vmem [shape: f32[32,48], index: 9, kind: input, shape index: {}]
  %s10 = inlined_call_operand.vmem [shape: f32[8,32], index: 10, kind: input, shape index: {}]
  %s11 = inlined_call_operand.vmem [shape: f32[32,8], index: 11, kind: input, shape index: {}]
  %s12 = inlined_call_operand.vmem [shape: f32[32,1], index: 12, kind: input, shape index: {}]
  %s13 = inlined_call_operand.vmem [shape: f32[32,1], index: 13, kind: input, shape index: {}]
  %s14 = inlined_call_operand.vmem [shape: f32[32,96], index: 14, kind: input, shape index: {}]
  %s15 = inlined_call_operand.vmem [shape: f32[32,1], index: 15, kind: input, shape index: {}]
  %s16 = inlined_call_operand.vmem [shape: f32[32,16], index: 16, kind: input, shape index: {}]
  %s17 = inlined_call_operand.hbm [shape: f32[1,32,128], index: 17, kind: output, shape index: {}]
  %s18 = sld [smem:[#allocation0]]
  $region78: #{tpu_custom_call.1} parent=0
    _
  %s20 = ssub.s32 1, %s18
  %s21 = scalar_select 0, %s20, %s18
  $region1: #{tpu_custom_call.1} parent=0
    #allocation2 [shape = 'u8[16384]{0}', space=vmem, size = 0x4000, scoped, tag = 'output window, operand 0, single buffered']
    #allocation3 [shape = 's32[1]{0}', space=sflag, size = 0x4, scoped, tag = 'scoped memory for tpu_custom_call.1']
    %22 = vsyncpa [#allocation3], 0
    // Predicated region
    $region2: #{tpu_custom_call.1} parent=1 // pred_check
      _
    $region3: #{tpu_custom_call.1} parent=1 // pred_check_branch
      %24 = sbr.rel (0) target = $region5
    $region4: #{tpu_custom_call.1} parent=1 // pred_region
      _
    $region5: #{tpu_custom_call.1} parent=1 // pred_fallthru
      _
    // Predicated region
    $region6: #{tpu_custom_call.1} parent=1 // pred_check
      _
    $region7: #{tpu_custom_call.1} parent=1 // pred_check_branch
      %26 = sbr.rel (0) target = $region9
    $region8: #{tpu_custom_call.1} parent=1 // pred_region
      _
    $region9: #{tpu_custom_call.1} parent=1 // pred_fallthru
      _
    // Predicated region
    $region10: #{tpu_custom_call.1} parent=1 // pred_check
      _
    $region11: #{tpu_custom_call.1} parent=1 // pred_check_branch
      %28 = sbr.rel (0) target = $region13
    $region12: #{tpu_custom_call.1} parent=1 // pred_region
      _
    $region13: #{tpu_custom_call.1} parent=1 // pred_fallthru
      _
    // Predicated region
    $region14: #{tpu_custom_call.1} parent=1 // pred_check
      _
    $region15: #{tpu_custom_call.1} parent=1 // pred_check_branch
      %30 = sbr.rel (0) target = $region17
    $region16: #{tpu_custom_call.1} parent=1 // pred_region
      _
    $region17: #{tpu_custom_call.1} parent=1 // pred_fallthru
      _
    // Predicated region
    $region18: #{tpu_custom_call.1} parent=1 // pred_check
      _
    $region19: #{tpu_custom_call.1} parent=1 // pred_check_branch
      %32 = sbr.rel (0) target = $region21
    $region20: #{tpu_custom_call.1} parent=1 // pred_region
      _
    $region21: #{tpu_custom_call.1} parent=1 // pred_fallthru
      _
    // Predicated region
    $region22: #{tpu_custom_call.1} parent=1 // pred_check
      _
    $region23: #{tpu_custom_call.1} parent=1 // pred_check_branch
      %34 = sbr.rel (0) target = $region25
    $region24: #{tpu_custom_call.1} parent=1 // pred_region
      _
    $region25: #{tpu_custom_call.1} parent=1 // pred_fallthru
      _
    // Predicated region
    $region26: #{tpu_custom_call.1} parent=1 // pred_check
      _
    $region27: #{tpu_custom_call.1} parent=1 // pred_check_branch
      %36 = sbr.rel (0) target = $region29
    $region28: #{tpu_custom_call.1} parent=1 // pred_region
      _
    $region29: #{tpu_custom_call.1} parent=1 // pred_fallthru
      _
    // Predicated region
    $region30: #{tpu_custom_call.1} parent=1 // pred_check
      _
    $region31: #{tpu_custom_call.1} parent=1 // pred_check_branch
      %38 = sbr.rel (0) target = $region33
    $region32: #{tpu_custom_call.1} parent=1 // pred_region
      _
    $region33: #{tpu_custom_call.1} parent=1 // pred_fallthru
      _
    // Predicated region
    $region34: #{tpu_custom_call.1} parent=1 // pred_check
      _
    $region35: #{tpu_custom_call.1} parent=1 // pred_check_branch
      %40 = sbr.rel (0) target = $region37
    $region36: #{tpu_custom_call.1} parent=1 // pred_region
      _
    $region37: #{tpu_custom_call.1} parent=1 // pred_fallthru
      _
    // Predicated region
    $region38: #{tpu_custom_call.1} parent=1 // pred_check
      _
    $region39: #{tpu_custom_call.1} parent=1 // pred_check_branch
      %42 = sbr.rel (0) target = $region41
    $region40: #{tpu_custom_call.1} parent=1 // pred_region
      _
    $region41: #{tpu_custom_call.1} parent=1 // pred_fallthru
      _
    // Predicated region
    $region42: #{tpu_custom_call.1} parent=1 // pred_check
      _
    $region43: #{tpu_custom_call.1} parent=1 // pred_check_branch
      %44 = sbr.rel (0) target = $region45
    $region44: #{tpu_custom_call.1} parent=1 // pred_region
      _
    $region45: #{tpu_custom_call.1} parent=1 // pred_fallthru
      _
    // Predicated region
    $region46: #{tpu_custom_call.1} parent=1 // pred_check
      _
    $region47: #{tpu_custom_call.1} parent=1 // pred_check_branch
      %46 = sbr.rel (0) target = $region49
    $region48: #{tpu_custom_call.1} parent=1 // pred_region
      _
    $region49: #{tpu_custom_call.1} parent=1 // pred_fallthru
      _
    // Predicated region
    $region50: #{tpu_custom_call.1} parent=1 // pred_check
      _
    $region51: #{tpu_custom_call.1} parent=1 // pred_check_branch
      %48 = sbr.rel (0) target = $region53
    $region52: #{tpu_custom_call.1} parent=1 // pred_region
      _
    $region53: #{tpu_custom_call.1} parent=1 // pred_fallthru
      _
    // Predicated region
    $region54: #{tpu_custom_call.1} parent=1 // pred_check
      _
    $region55: #{tpu_custom_call.1} parent=1 // pred_check_branch
      %50 = sbr.rel (0) target = $region57
    $region56: #{tpu_custom_call.1} parent=1 // pred_region
      _
    $region57: #{tpu_custom_call.1} parent=1 // pred_fallthru
      _
    // Predicated region
    $region58: #{tpu_custom_call.1} parent=1 // pred_check
      _
    $region59: #{tpu_custom_call.1} parent=1 // pred_check_branch
      %52 = sbr.rel (0) target = $region61
    $region60: #{tpu_custom_call.1} parent=1 // pred_region
      _
    $region61: #{tpu_custom_call.1} parent=1 // pred_fallthru
      _
    // Predicated region
    $region62: #{tpu_custom_call.1} parent=1 // pred_check
      _
    $region63: #{tpu_custom_call.1} parent=1 // pred_check_branch
      %54 = sbr.rel (0) target = $region65
    $region64: #{tpu_custom_call.1} parent=1 // pred_region
      _
    $region65: #{tpu_custom_call.1} parent=1 // pred_fallthru
      _
    // Predicated region
    $region66: #{tpu_custom_call.1} parent=1 // pred_check
      _
    $region67: #{tpu_custom_call.1} parent=1 // pred_check_branch
      %56 = sbr.rel (0) target = $region69
    $region68: #{tpu_custom_call.1} parent=1 // pred_region
      _
    $region69: #{tpu_custom_call.1} parent=1 // pred_fallthru
      _
    %v57 = vld [vmem:[%s0] sm:$0xff]
    %v58 = vld [vmem:[%s0 + $0x8] sm:$0xff]
    %v59 = vld [vmem:[%s2] sm:$0x1]
    %v60 = vld [vmem:[%s3] sm:$0xff]
    %v61 = vld [vmem:[%s3 + $0x8] sm:$0xff]
    %v62 = vld [vmem:[%s3 + $0x10] sm:$0xff]
    %v63 = vld [vmem:[%s3 + $0x18] sm:$0xff]
    %v64 = vld [vmem:[%s3 + $0x20] sm:$0xff]
    %v65 = vld [vmem:[%s3 + $0x28] sm:$0xff]
    %v66 = vld [vmem:[%s3 + $0x30] sm:$0xff]
    %v67 = vld [vmem:[%s3 + $0x38] sm:$0xff]
    %v68 = vld [vmem:[%s3 + $0x40] sm:$0xff]
    %v69 = vld [vmem:[%s3 + $0x48] sm:$0xff]
    %v70 = vld [vmem:[%s3 + $0x50] sm:$0xff]
    %v71 = vld [vmem:[%s3 + $0x58] sm:$0xff]
    %v72 = vld [vmem:[%s3 + $0x60] sm:$0xff]
    %v73 = vld [vmem:[%s3 + $0x68] sm:$0xff]
    %v74 = vld [vmem:[%s3 + $0x70] sm:$0xff]
    %v75 = vld [vmem:[%s3 + $0x78] sm:$0xff]
    %v76 = vld [vmem:[%s4] sm:$0x3]
    %v77 = vld [vmem:[%s5] sm:$0xff]
    %v78 = vld [vmem:[%s6] sm:$0xff]
    %v79 = vld [vmem:[%s6 + $0x8] sm:$0xff]
    %v80 = vld [vmem:[%s7] sm:$0xff]
    %v81 = vld [vmem:[%s7 + $0x8] sm:$0xff]
    %v82 = vld [vmem:[%s8] sm:$0xff]
    %v83 = vld [vmem:[%s8 + $0x8] sm:$0xff]
    %84 = vmatpush.msra.mxu0 %v75
    %85 = vmatpush.msra.mxu0 %v74
    %86 = vmatpush.msra.mxu0 %v73
    %87 = vmatpush.msra.mxu0 %v72
    %88 = vmatpush.msra.mxu0 %v71
    %89 = vmatpush.msra.mxu0 %v70
    %90 = vmatpush.msra.mxu0 %v69
    %91 = vmatpush.msra.mxu0 %v68
    %92 = vmatpush.msra.mxu0 %v67
    %93 = vmatpush.msra.mxu0 %v66
    %94 = vmatpush.msra.mxu0 %v65
    %95 = vmatpush.msra.mxu0 %v64
    %96 = vmatpush.msra.mxu0 %v63
    %97 = vmatpush.msra.mxu0 %v62
    %98 = vmatpush.msra.mxu0 %v61
    %99 = vmatpush.msra.mxu0 %v60
    %100 = vmatmul.f32.gmra.mxu0 %v57
    %v101 = vpop.f32.mrf.mxu0
    %v102 = vadd.f32 0.0, %v101
    %103 = vmatmul.f32.gmra.mxu0 %v58
    %v104 = vpop.f32.mrf.mxu0
    %v105 = vadd.f32 0.0, %v104
    %106 = vdwg.mxu0
    %v107 = vmul.f32 %v57, %v57
    %v108 = vmul.f32 %v58, %v58
    %109 = vmatpush.msra.mxu0 %v75
    %110 = vmatpush.msra.mxu0 %v74
    %111 = vmatpush.msra.mxu0 %v73
    %112 = vmatpush.msra.mxu0 %v72
    %113 = vmatpush.msra.mxu0 %v71
    %114 = vmatpush.msra.mxu0 %v70
    %115 = vmatpush.msra.mxu0 %v69
    %116 = vmatpush.msra.mxu0 %v68
    %117 = vmatpush.msra.mxu0 %v67
    %118 = vmatpush.msra.mxu0 %v66
    %119 = vmatpush.msra.mxu0 %v65
    %120 = vmatpush.msra.mxu0 %v64
    %121 = vmatpush.msra.mxu0 %v63
    %122 = vmatpush.msra.mxu0 %v62
    %123 = vmatpush.msra.mxu0 %v61
    %124 = vmatpush.msra.mxu0 %v60
    %125 = vmatmul.f32.gmra.mxu0 %v107
    %v126 = vpop.f32.mrf.mxu0
    %v127 = vadd.f32 0.0, %v126
    %128 = vmatmul.f32.gmra.mxu0 %v108
    %v129 = vpop.f32.mrf.mxu0
    %v130 = vadd.f32 0.0, %v129
    %131 = vdwg.mxu0
    %vm132 = vcmask 130048
    %v134 = vsel %vm132, %v77, 0
    %136 = vmatpush.msra.mxu0 0.0
    %137 = vmatpush.msra.mxu0 0.0
    %138 = vmatpush.msra.mxu0 0.0
    %139 = vmatpush.msra.mxu0 0.0
    %140 = vmatpush.msra.mxu0 0.0
    %141 = vmatpush.msra.mxu0 0.0
    %142 = vmatpush.msra.mxu0 0.0
    %143 = vmatpush.msra.mxu0 0.0
    %144 = vmatpush.msra.mxu0 0.0
    %145 = vmatpush.msra.mxu0 0.0
    %146 = vmatpush.msra.mxu0 0.0
    %147 = vmatpush.msra.mxu0 0.0
    %148 = vmatpush.msra.mxu0 0.0
    %149 = vmatpush.msra.mxu0 0.0
    %150 = vmatpush.msra.mxu0 %v105
    %151 = vmatpush.msra.mxu0 %v102
    %152 = vmatmul.f32.gmra.mxu0 %v134
    %v153 = vpop.f32.mrf.mxu0
    %v154 = vadd.f32 0.0, %v153
    %155 = vdwg.mxu0
    %156 = vmatpush.msra.mxu0 0.0
    %157 = vmatpush.msra.mxu0 0.0
    %158 = vmatpush.msra.mxu0 0.0
    %159 = vmatpush.msra.mxu0 0.0
    %160 = vmatpush.msra.mxu0 0.0
    %161 = vmatpush.msra.mxu0 0.0
    %162 = vmatpush.msra.mxu0 0.0
    %163 = vmatpush.msra.mxu0 0.0
    %164 = vmatpush.msra.mxu0 0.0
    %165 = vmatpush.msra.mxu0 0.0
    %166 = vmatpush.msra.mxu0 0.0
    %167 = vmatpush.msra.mxu0 0.0
    %168 = vmatpush.msra.mxu0 0.0
    %169 = vmatpush.msra.mxu0 0.0
    %170 = vmatpush.msra.mxu0 %v130
    %171 = vmatpush.msra.mxu0 %v127
    %172 = vmatmul.f32.gmra.mxu0 %v134
    %v173 = vpop.f32.mrf.mxu0
    %v174 = vadd.f32 0.0, %v173
    %175 = vdwg.mxu0
    %v176 = vmul.f32 %v154, 0.03125
    %v177 = vmul.f32 %v174, 0.03125
    %v178 = vmul.f32 %v176, %v176
    %v179 = vsub.f32 %v177, %v178
    %v180 = vadd.f32 %v179, 1e-05
    %v181 = vrsqrt.pop %v180
    %v182 = vmul.f32 %v181, %v180
    %v183 = vmul.f32 %v182, %v181
    %v184 = vmul.f32 0.5, %v183
    %v185 = vsub.f32 1.5, %v184
    %v186 = vmul.f32 %v181, %v185
    %vm187 = vweird.f32 %v180
    %vm188 = vweird.f32 %v181
    %vm189 = vmor %vm187, %vm188
    %v190 = vsel %vm189, %v181, %v186
    %vm191 = vcmask 64512
    %v193 = vsel %vm191, %v78, 0
    %v196 = vsel %vm191, %v79, 0
    %198 = vmatpush.msra.mxu0 0.0
    %199 = vmatpush.msra.mxu0 0.0
    %200 = vmatpush.msra.mxu0 0.0
    %201 = vmatpush.msra.mxu0 0.0
    %202 = vmatpush.msra.mxu0 0.0
    %203 = vmatpush.msra.mxu0 0.0
    %204 = vmatpush.msra.mxu0 0.0
    %205 = vmatpush.msra.mxu0 0.0
    %206 = vmatpush.msra.mxu0 0.0
    %207 = vmatpush.msra.mxu0 0.0
    %208 = vmatpush.msra.mxu0 0.0
    %209 = vmatpush.msra.mxu0 0.0
    %210 = vmatpush.msra.mxu0 0.0
    %211 = vmatpush.msra.mxu0 0.0
    %212 = vmatpush.msra.mxu0 0.0
    %213 = vmatpush.msra.mxu0 %v190
    %214 = vmatmul.f32.gmra.mxu0 %v193
    %v215 = vpop.f32.mrf.mxu0
    %v216 = vadd.f32 0.0, %v215
    %217 = vmatmul.f32.gmra.mxu0 %v196
    %v218 = vpop.f32.mrf.mxu0
    %v219 = vadd.f32 0.0, %v218
    %220 = vdwg.mxu0
    %222 = vset.pattern.permute.xlu0 0
    %223 = vperm.xlu0 %222, %v80
    %v224 = vpop.permute.xlu0 %223
    %227 = vset.pattern.permute.xlu0 0
    %228 = vperm.xlu0 %227, %v81
    %v229 = vpop.permute.xlu0 %228
    %v231 = vmul.f32 %v216, %v224
    %v232 = vmul.f32 %v219, %v229
    %233 = vmatpush.msra.mxu0 0.0
    %234 = vmatpush.msra.mxu0 0.0
    %235 = vmatpush.msra.mxu0 0.0
    %236 = vmatpush.msra.mxu0 0.0
    %237 = vmatpush.msra.mxu0 0.0
    %238 = vmatpush.msra.mxu0 0.0
    %239 = vmatpush.msra.mxu0 0.0
    %240 = vmatpush.msra.mxu0 0.0
    %241 = vmatpush.msra.mxu0 0.0
    %242 = vmatpush.msra.mxu0 0.0
    %243 = vmatpush.msra.mxu0 0.0
    %244 = vmatpush.msra.mxu0 0.0
    %245 = vmatpush.msra.mxu0 0.0
    %246 = vmatpush.msra.mxu0 0.0
    %247 = vmatpush.msra.mxu0 0.0
    %248 = vmatpush.msra.mxu0 %v176
    %249 = vmatmul.f32.gmra.mxu0 %v193
    %v250 = vpop.f32.mrf.mxu0
    %v251 = vadd.f32 0.0, %v250
    %252 = vmatmul.f32.gmra.mxu0 %v196
    %v253 = vpop.f32.mrf.mxu0
    %v254 = vadd.f32 0.0, %v253
    %255 = vdwg.mxu0
    %v256 = vmul.f32 %v251, %v231
    %v257 = vmul.f32 %v254, %v232
    %259 = vset.pattern.permute.xlu0 0
    %260 = vperm.xlu0 %259, %v82
    %v261 = vpop.permute.xlu0 %260
    %264 = vset.pattern.permute.xlu0 0
    %265 = vperm.xlu0 %264, %v83
    %v266 = vpop.permute.xlu0 %265
    %v268 = vsub.f32 %v261, %v256
    %v269 = vsub.f32 %v266, %v257
    %vm270 = vcmask 15360
    %v272 = vsel %vm270, %v231, 0
    %v275 = vsel %vm270, %v232, 0
    %vm277 = vcmask 1041408
    %v279 = vsel %vm277, %v76, 0
    %281 = vmatpush.msra.mxu0 0.0
    %282 = vmatpush.msra.mxu0 0.0
    %283 = vmatpush.msra.mxu0 0.0
    %284 = vmatpush.msra.mxu0 0.0
    %285 = vmatpush.msra.mxu0 0.0
    %286 = vmatpush.msra.mxu0 0.0
    %287 = vmatpush.msra.mxu0 0.0
    %288 = vmatpush.msra.mxu0 0.0
    %289 = vmatpush.msra.mxu0 0.0
    %290 = vmatpush.msra.mxu0 0.0
    %291 = vmatpush.msra.mxu0 0.0
    %292 = vmatpush.msra.mxu0 0.0
    %293 = vmatpush.msra.mxu0 0.0
    %294 = vmatpush.msra.mxu0 0.0
    %295 = vmatpush.msra.mxu0 0.0
    %296 = vmatpush.msra.mxu0 %v279
    %297 = vmatmul.f32.gmra.mxu0 %v272
    %v298 = vpop.f32.mrf.mxu0
    %v299 = vadd.f32 0.0, %v298
    %300 = vmatmul.f32.gmra.mxu0 %v275
    %v301 = vpop.f32.mrf.mxu0
    %v302 = vadd.f32 0.0, %v301
    %303 = vdwg.mxu0
    %v305 = vsel %vm270, %v268, 0
    %v308 = vsel %vm270, %v269, 0
    %310 = vmatpush.msra.mxu0 0.0
    %311 = vmatpush.msra.mxu0 0.0
    %312 = vmatpush.msra.mxu0 0.0
    %313 = vmatpush.msra.mxu0 0.0
    %314 = vmatpush.msra.mxu0 0.0
    %315 = vmatpush.msra.mxu0 0.0
    %316 = vmatpush.msra.mxu0 0.0
    %317 = vmatpush.msra.mxu0 0.0
    %318 = vmatpush.msra.mxu0 0.0
    %319 = vmatpush.msra.mxu0 0.0
    %320 = vmatpush.msra.mxu0 0.0
    %321 = vmatpush.msra.mxu0 0.0
    %322 = vmatpush.msra.mxu0 0.0
    %323 = vmatpush.msra.mxu0 0.0
    %324 = vmatpush.msra.mxu0 0.0
    %325 = vmatpush.msra.mxu0 %v279
    %326 = vmatmul.f32.gmra.mxu0 %v305
    %v327 = vpop.f32.mrf.mxu0
    %v328 = vadd.f32 0.0, %v327
    %329 = vmatmul.f32.gmra.mxu0 %v308
    %v330 = vpop.f32.mrf.mxu0
    %v331 = vadd.f32 0.0, %v330
    %332 = vdwg.mxu0
    %v333 = vmul.f32 %v57, %v299
    %v334 = vmul.f32 %v58, %v302
    %v335 = vadd.f32 %v333, %v328
    %v336 = vadd.f32 %v334, %v331
    %v337 = vxor.u32 %v335, 2147483648
    %v338 = vxor.u32 %v336, 2147483648
    %v339 = vmul.f32 %v337, 1.442695
    %v340 = vpow.pop %v339
    %v341 = vmul.f32 %v338, 1.442695
    %v342 = vpow.pop %v341
    %v343 = vadd.f32 %v340, 1.0
    %v344 = vadd.f32 %v342, 1.0
    %v345 = vrcp.pop %v343
    %v346 = vmul.f32 %v343, %v345
    %v347 = vsub.f32 1.0, %v346
    %v348 = vmul.f32 %v345, %v347
    %v349 = vadd.f32 %v345, %v348
    %vm350 = vweird.f32 %v343
    %vm351 = vweird.f32 %v345
    %vm352 = vmor %vm350, %vm351
    %v353 = vsel %vm352, %v345, %v349
    %v354 = vand.u32 2147483647, %v343
    %vm355 = vcmp.eq.f32.partialorder %v354, 8.507059e+37
    %v356 = vand.u32 %v343, 2147483648
    %v357 = vor.u32 1.1754944e-38, %v356
    %v358 = vsel %vm355, %v357, %v353
    %v359 = vmul.f32 1.0, %v358
    %v360 = vrcp.pop %v344
    %v361 = vmul.f32 %v344, %v360
    %v362 = vsub.f32 1.0, %v361
    %v363 = vmul.f32 %v360, %v362
    %v364 = vadd.f32 %v360, %v363
    %vm365 = vweird.f32 %v344
    %vm366 = vweird.f32 %v360
    %vm367 = vmor %vm365, %vm366
    %v368 = vsel %vm367, %v360, %v364
    %v369 = vand.u32 2147483647, %v344
    %vm370 = vcmp.eq.f32.partialorder %v369, 8.507059e+37
    %v371 = vand.u32 %v344, 2147483648
    %v372 = vor.u32 1.1754944e-38, %v371
    %v373 = vsel %vm370, %v372, %v368
    %v374 = vmul.f32 1.0, %v373
    %v375 = vmul.f32 %v335, %v359
    %v376 = vmul.f32 %v336, %v374
    %v378 = vperm.slane %v59, 0
    %v380 = vmul.f32 %v375, %v378
    %v381 = vmul.f32 %v376, %v378
    %v382 = vld [vmem:[%s9] sm:$0xff]
    %v383 = vld [vmem:[%s9 + $0x8] sm:$0xff]
    %v384 = vld [vmem:[%s9 + $0x10] sm:$0xff]
    %v385 = vld [vmem:[%s9 + $0x18] sm:$0xff]
    %388 = vrot.lane.b32.xlu0 %v380, 1
    %v389 = vpop.permute.xlu0 %388
    %390 = vrot.lane.b32.xlu0 %v381, 1
    %v391 = vpop.permute.xlu0 %390
    %394 = vrot.lane.b32.xlu0 %v380, 127
    %v395 = vpop.permute.xlu0 %394
    %396 = vrot.lane.b32.xlu0 %v381, 127
    %v397 = vpop.permute.xlu0 %396
    %v400 = vld [vmem:[%s1] sm:$0xff]
    %v401 = vld [vmem:[%s1 + $0x8] sm:$0xff]
    %v402 = vld [vmem:[%s1 + $0x10] sm:$0xff]
    %v403 = vld [vmem:[%s1 + $0x18] sm:$0xff]
    %v405 = vsel %vm270, %v400, 0
    %v408 = vsel %vm270, %v401, 0
    %v411 = vsel %vm270, %v402, 0
    %v414 = vsel %vm270, %v403, 0
    %416 = vmatpush.msra.mxu0 0.0
    %417 = vmatpush.msra.mxu0 0.0
    %418 = vmatpush.msra.mxu0 0.0
    %419 = vmatpush.msra.mxu0 0.0
    %420 = vmatpush.msra.mxu0 0.0
    %421 = vmatpush.msra.mxu0 0.0
    %422 = vmatpush.msra.mxu0 0.0
    %423 = vmatpush.msra.mxu0 0.0
    %424 = vmatpush.msra.mxu0 0.0
    %425 = vmatpush.msra.mxu0 0.0
    %426 = vmatpush.msra.mxu0 0.0
    %427 = vmatpush.msra.mxu0 0.0
    %428 = vmatpush.msra.mxu0 0.0
    %429 = vmatpush.msra.mxu0 0.0
    %430 = vmatpush.msra.mxu0 0.0
    %431 = vmatpush.msra.mxu0 %v279
    %432 = vmatmul.f32.gmra.mxu0 %v405
    %v433 = vpop.f32.mrf.mxu0
    %v434 = vadd.f32 0.0, %v433
    %435 = vmatmul.f32.gmra.mxu0 %v408
    %v436 = vpop.f32.mrf.mxu0
    %v437 = vadd.f32 0.0, %v436
    %438 = vmatmul.f32.gmra.mxu0 %v411
    %v439 = vpop.f32.mrf.mxu0
    %v440 = vadd.f32 0.0, %v439
    %441 = vmatmul.f32.gmra.mxu0 %v414
    %v442 = vpop.f32.mrf.mxu0
    %v443 = vadd.f32 0.0, %v442
    %444 = vdwg.mxu0
    %vm445 = vcmask 392192
    %v447 = vsel %vm445, %v382, 0
    %v450 = vsel %vm445, %v383, 0
    %v453 = vsel %vm445, %v384, 0
    %v456 = vsel %vm445, %v385, 0
    %458 = vmatpush.msra.mxu0 0.0
    %459 = vmatpush.msra.mxu0 0.0
    %460 = vmatpush.msra.mxu0 0.0
    %461 = vmatpush.msra.mxu0 0.0
    %462 = vmatpush.msra.mxu0 0.0
    %463 = vmatpush.msra.mxu0 0.0
    %464 = vmatpush.msra.mxu0 0.0
    %465 = vmatpush.msra.mxu0 0.0
    %466 = vmatpush.msra.mxu0 0.0
    %467 = vmatpush.msra.mxu0 0.0
    %468 = vmatpush.msra.mxu0 %v397
    %469 = vmatpush.msra.mxu0 %v395
    %470 = vmatpush.msra.mxu0 %v381
    %471 = vmatpush.msra.mxu0 %v380
    %472 = vmatpush.msra.mxu0 %v391
    %473 = vmatpush.msra.mxu0 %v389
    %474 = vmatmul.f32.gmra.mxu0 %v447
    %v475 = vpop.f32.mrf.mxu0
    %v476 = vadd.f32 %v434, %v475
    %477 = vmatmul.f32.gmra.mxu0 %v450
    %v478 = vpop.f32.mrf.mxu0
    %v479 = vadd.f32 %v437, %v478
    %480 = vmatmul.f32.gmra.mxu0 %v453
    %v481 = vpop.f32.mrf.mxu0
    %v482 = vadd.f32 %v440, %v481
    %483 = vmatmul.f32.gmra.mxu0 %v456
    %v484 = vpop.f32.mrf.mxu0
    %v485 = vadd.f32 %v443, %v484
    %486 = vdwg.mxu0
    %v487 = vmul.f32 %v476, %v378
    %v488 = vmul.f32 %v479, %v378
    %v489 = vmul.f32 %v482, %v378
    %v490 = vmul.f32 %v485, %v378
    %v491 = vld [vmem:[%s10] sm:$0xff]
    %v492 = vld [vmem:[%s11] sm:$0xff]
    %v493 = vld [vmem:[%s11 + $0x8] sm:$0xff]
    %v494 = vld [vmem:[%s11 + $0x10] sm:$0xff]
    %v495 = vld [vmem:[%s11 + $0x18] sm:$0xff]
    %v496 = vld [vmem:[%s12] sm:$0xff]
    %v497 = vld [vmem:[%s12 + $0x8] sm:$0xff]
    %v498 = vld [vmem:[%s12 + $0x10] sm:$0xff]
    %v499 = vld [vmem:[%s12 + $0x18] sm:$0xff]
    %v500 = vld [vmem:[%s13] sm:$0xff]
    %v501 = vld [vmem:[%s13 + $0x8] sm:$0xff]
    %v502 = vld [vmem:[%s13 + $0x10] sm:$0xff]
    %v503 = vld [vmem:[%s13 + $0x18] sm:$0xff]
    %504 = vmatpush.msra.mxu0 %v75
    %505 = vmatpush.msra.mxu0 %v74
    %506 = vmatpush.msra.mxu0 %v73
    %507 = vmatpush.msra.mxu0 %v72
    %508 = vmatpush.msra.mxu0 %v71
    %509 = vmatpush.msra.mxu0 %v70
    %510 = vmatpush.msra.mxu0 %v69
    %511 = vmatpush.msra.mxu0 %v68
    %512 = vmatpush.msra.mxu0 %v67
    %513 = vmatpush.msra.mxu0 %v66
    %514 = vmatpush.msra.mxu0 %v65
    %515 = vmatpush.msra.mxu0 %v64
    %516 = vmatpush.msra.mxu0 %v63
    %517 = vmatpush.msra.mxu0 %v62
    %518 = vmatpush.msra.mxu0 %v61
    %519 = vmatpush.msra.mxu0 %v60
    %520 = vmatmul.f32.gmra.mxu0 %v487
    %v521 = vpop.f32.mrf.mxu0
    %v522 = vadd.f32 0.0, %v521
    %523 = vmatmul.f32.gmra.mxu0 %v488
    %v524 = vpop.f32.mrf.mxu0
    %v525 = vadd.f32 0.0, %v524
    %526 = vmatmul.f32.gmra.mxu0 %v489
    %v527 = vpop.f32.mrf.mxu0
    %v528 = vadd.f32 0.0, %v527
    %529 = vmatmul.f32.gmra.mxu0 %v490
    %v530 = vpop.f32.mrf.mxu0
    %v531 = vadd.f32 0.0, %v530
    %532 = vdwg.mxu0
    %v533 = vmul.f32 %v487, %v487
    %v534 = vmul.f32 %v488, %v488
    %v535 = vmul.f32 %v489, %v489
    %v536 = vmul.f32 %v490, %v490
    %537 = vmatpush.msra.mxu0 %v75
    %538 = vmatpush.msra.mxu0 %v74
    %539 = vmatpush.msra.mxu0 %v73
    %540 = vmatpush.msra.mxu0 %v72
    %541 = vmatpush.msra.mxu0 %v71
    %542 = vmatpush.msra.mxu0 %v70
    %543 = vmatpush.msra.mxu0 %v69
    %544 = vmatpush.msra.mxu0 %v68
    %545 = vmatpush.msra.mxu0 %v67
    %546 = vmatpush.msra.mxu0 %v66
    %547 = vmatpush.msra.mxu0 %v65
    %548 = vmatpush.msra.mxu0 %v64
    %549 = vmatpush.msra.mxu0 %v63
    %550 = vmatpush.msra.mxu0 %v62
    %551 = vmatpush.msra.mxu0 %v61
    %552 = vmatpush.msra.mxu0 %v60
    %553 = vmatmul.f32.gmra.mxu0 %v533
    %v554 = vpop.f32.mrf.mxu0
    %v555 = vadd.f32 0.0, %v554
    %556 = vmatmul.f32.gmra.mxu0 %v534
    %v557 = vpop.f32.mrf.mxu0
    %v558 = vadd.f32 0.0, %v557
    %559 = vmatmul.f32.gmra.mxu0 %v535
    %v560 = vpop.f32.mrf.mxu0
    %v561 = vadd.f32 0.0, %v560
    %562 = vmatmul.f32.gmra.mxu0 %v536
    %v563 = vpop.f32.mrf.mxu0
    %v564 = vadd.f32 0.0, %v563
    %565 = vdwg.mxu0
    %vm566 = vcmask 261120
    %v568 = vsel %vm566, %v491, 0
    %570 = vmatpush.msra.mxu0 0.0
    %571 = vmatpush.msra.mxu0 0.0
    %572 = vmatpush.msra.mxu0 0.0
    %573 = vmatpush.msra.mxu0 0.0
    %574 = vmatpush.msra.mxu0 0.0
    %575 = vmatpush.msra.mxu0 0.0
    %576 = vmatpush.msra.mxu0 0.0
    %577 = vmatpush.msra.mxu0 0.0
    %578 = vmatpush.msra.mxu0 0.0
    %579 = vmatpush.msra.mxu0 0.0
    %580 = vmatpush.msra.mxu0 0.0
    %581 = vmatpush.msra.mxu0 0.0
    %582 = vmatpush.msra.mxu0 %v531
    %583 = vmatpush.msra.mxu0 %v528
    %584 = vmatpush.msra.mxu0 %v525
    %585 = vmatpush.msra.mxu0 %v522
    %586 = vmatmul.f32.gmra.mxu0 %v568
    %v587 = vpop.f32.mrf.mxu0
    %v588 = vadd.f32 0.0, %v587
    %589 = vdwg.mxu0
    %590 = vmatpush.msra.mxu0 0.0
    %591 = vmatpush.msra.mxu0 0.0
    %592 = vmatpush.msra.mxu0 0.0
    %593 = vmatpush.msra.mxu0 0.0
    %594 = vmatpush.msra.mxu0 0.0
    %595 = vmatpush.msra.mxu0 0.0
    %596 = vmatpush.msra.mxu0 0.0
    %597 = vmatpush.msra.mxu0 0.0
    %598 = vmatpush.msra.mxu0 0.0
    %599 = vmatpush.msra.mxu0 0.0
    %600 = vmatpush.msra.mxu0 0.0
    %601 = vmatpush.msra.mxu0 0.0
    %602 = vmatpush.msra.mxu0 %v564
    %603 = vmatpush.msra.mxu0 %v561
    %604 = vmatpush.msra.mxu0 %v558
    %605 = vmatpush.msra.mxu0 %v555
    %606 = vmatmul.f32.gmra.mxu0 %v568
    %v607 = vpop.f32.mrf.mxu0
    %v608 = vadd.f32 0.0, %v607
    %609 = vdwg.mxu0
    %v610 = vmul.f32 %v588, 0.015625
    %v611 = vmul.f32 %v608, 0.015625
    %v612 = vmul.f32 %v610, %v610
    %v613 = vsub.f32 %v611, %v612
    %v614 = vadd.f32 %v613, 1e-05
    %v615 = vrsqrt.pop %v614
    %v616 = vmul.f32 %v615, %v614
    %v617 = vmul.f32 %v616, %v615
    %v618 = vmul.f32 0.5, %v617
    %v619 = vsub.f32 1.5, %v618
    %v620 = vmul.f32 %v615, %v619
    %vm621 = vweird.f32 %v614
    %vm622 = vweird.f32 %v615
    %vm623 = vmor %vm621, %vm622
    %v624 = vsel %vm623, %v615, %v620
    %v626 = vsel %vm191, %v492, 0
    %v629 = vsel %vm191, %v493, 0
    %v632 = vsel %vm191, %v494, 0
    %v635 = vsel %vm191, %v495, 0
    %637 = vmatpush.msra.mxu0 0.0
    %638 = vmatpush.msra.mxu0 0.0
    %639 = vmatpush.msra.mxu0 0.0
    %640 = vmatpush.msra.mxu0 0.0
    %641 = vmatpush.msra.mxu0 0.0
    %642 = vmatpush.msra.mxu0 0.0
    %643 = vmatpush.msra.mxu0 0.0
    %644 = vmatpush.msra.mxu0 0.0
    %645 = vmatpush.msra.mxu0 0.0
    %646 = vmatpush.msra.mxu0 0.0
    %647 = vmatpush.msra.mxu0 0.0
    %648 = vmatpush.msra.mxu0 0.0
    %649 = vmatpush.msra.mxu0 0.0
    %650 = vmatpush.msra.mxu0 0.0
    %651 = vmatpush.msra.mxu0 0.0
    %652 = vmatpush.msra.mxu0 %v624
    %653 = vmatmul.f32.gmra.mxu0 %v626
    %v654 = vpop.f32.mrf.mxu0
    %v655 = vadd.f32 0.0, %v654
    %656 = vmatmul.f32.gmra.mxu0 %v629
    %v657 = vpop.f32.mrf.mxu0
    %v658 = vadd.f32 0.0, %v657
    %659 = vmatmul.f32.gmra.mxu0 %v632
    %v660 = vpop.f32.mrf.mxu0
    %v661 = vadd.f32 0.0, %v660
    %662 = vmatmul.f32.gmra.mxu0 %v635
    %v663 = vpop.f32.mrf.mxu0
    %v664 = vadd.f32 0.0, %v663
    %665 = vdwg.mxu0
    %667 = vset.pattern.permute.xlu0 0
    %668 = vperm.xlu0 %667, %v496
    %v669 = vpop.permute.xlu0 %668
    %672 = vset.pattern.permute.xlu0 0
    %673 = vperm.xlu0 %672, %v497
    %v674 = vpop.permute.xlu0 %673
    %677 = vset.pattern.permute.xlu0 0
    %678 = vperm.xlu0 %677, %v498
    %v679 = vpop.permute.xlu0 %678
    %682 = vset.pattern.permute.xlu0 0
    %683 = vperm.xlu0 %682, %v499
    %v684 = vpop.permute.xlu0 %683
    %v686 = vmul.f32 %v655, %v669
    %v687 = vmul.f32 %v658, %v674
    %v688 = vmul.f32 %v661, %v679
    %v689 = vmul.f32 %v664, %v684
    %690 = vmatpush.msra.mxu0 0.0
    %691 = vmatpush.msra.mxu0 0.0
    %692 = vmatpush.msra.mxu0 0.0
    %693 = vmatpush.msra.mxu0 0.0
    %694 = vmatpush.msra.mxu0 0.0
    %695 = vmatpush.msra.mxu0 0.0
    %696 = vmatpush.msra.mxu0 0.0
    %697 = vmatpush.msra.mxu0 0.0
    %698 = vmatpush.msra.mxu0 0.0
    %699 = vmatpush.msra.mxu0 0.0
    %700 = vmatpush.msra.mxu0 0.0
    %701 = vmatpush.msra.mxu0 0.0
    %702 = vmatpush.msra.mxu0 0.0
    %703 = vmatpush.msra.mxu0 0.0
    %704 = vmatpush.msra.mxu0 0.0
    %705 = vmatpush.msra.mxu0 %v610
    %706 = vmatmul.f32.gmra.mxu0 %v626
    %v707 = vpop.f32.mrf.mxu0
    %v708 = vadd.f32 0.0, %v707
    %709 = vmatmul.f32.gmra.mxu0 %v629
    %v710 = vpop.f32.mrf.mxu0
    %v711 = vadd.f32 0.0, %v710
    %712 = vmatmul.f32.gmra.mxu0 %v632
    %v713 = vpop.f32.mrf.mxu0
    %v714 = vadd.f32 0.0, %v713
    %715 = vmatmul.f32.gmra.mxu0 %v635
    %v716 = vpop.f32.mrf.mxu0
    %v717 = vadd.f32 0.0, %v716
    %718 = vdwg.mxu0
    %v719 = vmul.f32 %v708, %v686
    %v720 = vmul.f32 %v711, %v687
    %v721 = vmul.f32 %v714, %v688
    %v722 = vmul.f32 %v717, %v689
    %724 = vset.pattern.permute.xlu0 0
    %725 = vperm.xlu0 %724, %v500
    %v726 = vpop.permute.xlu0 %725
    %729 = vset.pattern.permute.xlu0 0
    %730 = vperm.xlu0 %729, %v501
    %v731 = vpop.permute.xlu0 %730
    %734 = vset.pattern.permute.xlu0 0
    %735 = vperm.xlu0 %734, %v502
    %v736 = vpop.permute.xlu0 %735
    %739 = vset.pattern.permute.xlu0 0
    %740 = vperm.xlu0 %739, %v503
    %v741 = vpop.permute.xlu0 %740
    %v743 = vsub.f32 %v726, %v719
    %v744 = vsub.f32 %v731, %v720
    %v745 = vsub.f32 %v736, %v721
    %v746 = vsub.f32 %v741, %v722
    %v748 = vsel %vm270, %v686, 0
    %v751 = vsel %vm270, %v687, 0
    %v754 = vsel %vm270, %v688, 0
    %v757 = vsel %vm270, %v689, 0
    %759 = vmatpush.msra.mxu0 0.0
    %760 = vmatpush.msra.mxu0 0.0
    %761 = vmatpush.msra.mxu0 0.0
    %762 = vmatpush.msra.mxu0 0.0
    %763 = vmatpush.msra.mxu0 0.0
    %764 = vmatpush.msra.mxu0 0.0
    %765 = vmatpush.msra.mxu0 0.0
    %766 = vmatpush.msra.mxu0 0.0
    %767 = vmatpush.msra.mxu0 0.0
    %768 = vmatpush.msra.mxu0 0.0
    %769 = vmatpush.msra.mxu0 0.0
    %770 = vmatpush.msra.mxu0 0.0
    %771 = vmatpush.msra.mxu0 0.0
    %772 = vmatpush.msra.mxu0 0.0
    %773 = vmatpush.msra.mxu0 0.0
    %774 = vmatpush.msra.mxu0 %v279
    %775 = vmatmul.f32.gmra.mxu0 %v748
    %v776 = vpop.f32.mrf.mxu0
    %v777 = vadd.f32 0.0, %v776
    %778 = vmatmul.f32.gmra.mxu0 %v751
    %v779 = vpop.f32.mrf.mxu0
    %v780 = vadd.f32 0.0, %v779
    %781 = vmatmul.f32.gmra.mxu0 %v754
    %v782 = vpop.f32.mrf.mxu0
    %v783 = vadd.f32 0.0, %v782
    %784 = vmatmul.f32.gmra.mxu0 %v757
    %v785 = vpop.f32.mrf.mxu0
    %v786 = vadd.f32 0.0, %v785
    %787 = vdwg.mxu0
    %v789 = vsel %vm270, %v743, 0
    %v792 = vsel %vm270, %v744, 0
    %v795 = vsel %vm270, %v745, 0
    %v798 = vsel %vm270, %v746, 0
    %800 = vmatpush.msra.mxu0 0.0
    %801 = vmatpush.msra.mxu0 0.0
    %802 = vmatpush.msra.mxu0 0.0
    %803 = vmatpush.msra.mxu0 0.0
    %804 = vmatpush.msra.mxu0 0.0
    %805 = vmatpush.msra.mxu0 0.0
    %806 = vmatpush.msra.mxu0 0.0
    %807 = vmatpush.msra.mxu0 0.0
    %808 = vmatpush.msra.mxu0 0.0
    %809 = vmatpush.msra.mxu0 0.0
    %810 = vmatpush.msra.mxu0 0.0
    %811 = vmatpush.msra.mxu0 0.0
    %812 = vmatpush.msra.mxu0 0.0
    %813 = vmatpush.msra.mxu0 0.0
    %814 = vmatpush.msra.mxu0 0.0
    %815 = vmatpush.msra.mxu0 %v279
    %816 = vmatmul.f32.gmra.mxu0 %v789
    %v817 = vpop.f32.mrf.mxu0
    %v818 = vadd.f32 0.0, %v817
    %819 = vmatmul.f32.gmra.mxu0 %v792
    %v820 = vpop.f32.mrf.mxu0
    %v821 = vadd.f32 0.0, %v820
    %822 = vmatmul.f32.gmra.mxu0 %v795
    %v823 = vpop.f32.mrf.mxu0
    %v824 = vadd.f32 0.0, %v823
    %825 = vmatmul.f32.gmra.mxu0 %v798
    %v826 = vpop.f32.mrf.mxu0
    %v827 = vadd.f32 0.0, %v826
    %828 = vdwg.mxu0
    %v829 = vmul.f32 %v487, %v777
    %v830 = vmul.f32 %v488, %v780
    %v831 = vmul.f32 %v489, %v783
    %v832 = vmul.f32 %v490, %v786
    %v833 = vadd.f32 %v829, %v818
    %v834 = vadd.f32 %v830, %v821
    %v835 = vadd.f32 %v831, %v824
    %v836 = vadd.f32 %v832, %v827
    %v837 = vxor.u32 %v833, 2147483648
    %v838 = vxor.u32 %v834, 2147483648
    %v839 = vxor.u32 %v835, 2147483648
    %v840 = vxor.u32 %v836, 2147483648
    %v841 = vmul.f32 %v837, 1.442695
    %v842 = vpow.pop %v841
    %v843 = vmul.f32 %v838, 1.442695
    %v844 = vpow.pop %v843
    %v845 = vmul.f32 %v839, 1.442695
    %v846 = vpow.pop %v845
    %v847 = vmul.f32 %v840, 1.442695
    %v848 = vpow.pop %v847
    %v849 = vadd.f32 %v842, 1.0
    %v850 = vadd.f32 %v844, 1.0
    %v851 = vadd.f32 %v846, 1.0
    %v852 = vadd.f32 %v848, 1.0
    %v853 = vrcp.pop %v849
    %v854 = vmul.f32 %v849, %v853
    %v855 = vsub.f32 1.0, %v854
    %v856 = vmul.f32 %v853, %v855
    %v857 = vadd.f32 %v853, %v856
    %vm858 = vweird.f32 %v849
    %vm859 = vweird.f32 %v853
    %vm860 = vmor %vm858, %vm859
    %v861 = vsel %vm860, %v853, %v857
    %v862 = vand.u32 2147483647, %v849
    %vm863 = vcmp.eq.f32.partialorder %v862, 8.507059e+37
    %v864 = vand.u32 %v849, 2147483648
    %v865 = vor.u32 1.1754944e-38, %v864
    %v866 = vsel %vm863, %v865, %v861
    %v867 = vmul.f32 1.0, %v866
    %v868 = vrcp.pop %v850
    %v869 = vmul.f32 %v850, %v868
    %v870 = vsub.f32 1.0, %v869
    %v871 = vmul.f32 %v868, %v870
    %v872 = vadd.f32 %v868, %v871
    %vm873 = vweird.f32 %v850
    %vm874 = vweird.f32 %v868
    %vm875 = vmor %vm873, %vm874
    %v876 = vsel %vm875, %v868, %v872
    %v877 = vand.u32 2147483647, %v850
    %vm878 = vcmp.eq.f32.partialorder %v877, 8.507059e+37
    %v879 = vand.u32 %v850, 2147483648
    %v880 = vor.u32 1.1754944e-38, %v879
    %v881 = vsel %vm878, %v880, %v876
    %v882 = vmul.f32 1.0, %v881
    %v883 = vrcp.pop %v851
    %v884 = vmul.f32 %v851, %v883
    %v885 = vsub.f32 1.0, %v884
    %v886 = vmul.f32 %v883, %v885
    %v887 = vadd.f32 %v883, %v886
    %vm888 = vweird.f32 %v851
    %vm889 = vweird.f32 %v883
    %vm890 = vmor %vm888, %vm889
    %v891 = vsel %vm890, %v883, %v887
    %v892 = vand.u32 2147483647, %v851
    %vm893 = vcmp.eq.f32.partialorder %v892, 8.507059e+37
    %v894 = vand.u32 %v851, 2147483648
    %v895 = vor.u32 1.1754944e-38, %v894
    %v896 = vsel %vm893, %v895, %v891
    %v897 = vmul.f32 1.0, %v896
    %v898 = vrcp.pop %v852
    %v899 = vmul.f32 %v852, %v898
    %v900 = vsub.f32 1.0, %v899
    %v901 = vmul.f32 %v898, %v900
    %v902 = vadd.f32 %v898, %v901
    %vm903 = vweird.f32 %v852
    %vm904 = vweird.f32 %v898
    %vm905 = vmor %vm903, %vm904
    %v906 = vsel %vm905, %v898, %v902
    %v907 = vand.u32 2147483647, %v852
    %vm908 = vcmp.eq.f32.partialorder %v907, 8.507059e+37
    %v909 = vand.u32 %v852, 2147483648
    %v910 = vor.u32 1.1754944e-38, %v909
    %v911 = vsel %vm908, %v910, %v906
    %v912 = vmul.f32 1.0, %v911
    %v913 = vmul.f32 %v833, %v867
    %v914 = vmul.f32 %v834, %v882
    %v915 = vmul.f32 %v835, %v897
    %v916 = vmul.f32 %v836, %v912
    %v917 = vmul.f32 %v913, %v378
    %v918 = vmul.f32 %v914, %v378
    %v919 = vmul.f32 %v915, %v378
    %v920 = vmul.f32 %v916, %v378
    %v921 = vld [vmem:[%s14] sm:$0xff]
    %v922 = vld [vmem:[%s14 + $0x8] sm:$0xff]
    %v923 = vld [vmem:[%s14 + $0x10] sm:$0xff]
    %v924 = vld [vmem:[%s14 + $0x18] sm:$0xff]
    %929 = vrot.lane.b32.xlu0 %v917, 1
    %v930 = vpop.permute.xlu0 %929
    %931 = vrot.lane.b32.xlu0 %v918, 1
    %v932 = vpop.permute.xlu0 %931
    %933 = vrot.lane.b32.xlu0 %v919, 1
    %v934 = vpop.permute.xlu0 %933
    %935 = vrot.lane.b32.xlu0 %v920, 1
    %v936 = vpop.permute.xlu0 %935
    %941 = vrot.lane.b32.xlu0 %v917, 127
    %v942 = vpop.permute.xlu0 %941
    %943 = vrot.lane.b32.xlu0 %v918, 127
    %v944 = vpop.permute.xlu0 %943
    %945 = vrot.lane.b32.xlu0 %v919, 127
    %v946 = vpop.permute.xlu0 %945
    %947 = vrot.lane.b32.xlu0 %v920, 127
    %v948 = vpop.permute.xlu0 %947
    %v953 = vld [vmem:[%s16] sm:$0xff]
    %v954 = vld [vmem:[%s16 + $0x8] sm:$0xff]
    %v955 = vld [vmem:[%s16 + $0x10] sm:$0xff]
    %v956 = vld [vmem:[%s16 + $0x18] sm:$0xff]
    %v958 = vsel %vm132, %v953, 0
    %v961 = vsel %vm132, %v954, 0
    %v964 = vsel %vm132, %v955, 0
    %v967 = vsel %vm132, %v956, 0
    %969 = vmatpush.msra.mxu0 0.0
    %970 = vmatpush.msra.mxu0 0.0
    %971 = vmatpush.msra.mxu0 0.0
    %972 = vmatpush.msra.mxu0 0.0
    %973 = vmatpush.msra.mxu0 0.0
    %974 = vmatpush.msra.mxu0 0.0
    %975 = vmatpush.msra.mxu0 0.0
    %976 = vmatpush.msra.mxu0 0.0
    %977 = vmatpush.msra.mxu0 0.0
    %978 = vmatpush.msra.mxu0 0.0
    %979 = vmatpush.msra.mxu0 0.0
    %980 = vmatpush.msra.mxu0 0.0
    %981 = vmatpush.msra.mxu0 0.0
    %982 = vmatpush.msra.mxu0 0.0
    %983 = vmatpush.msra.mxu0 %v58
    %984 = vmatpush.msra.mxu0 %v57
    %985 = vmatmul.f32.gmra.mxu0 %v958
    %v986 = vpop.f32.mrf.mxu0
    %v987 = vadd.f32 0.0, %v986
    %988 = vmatmul.f32.gmra.mxu0 %v961
    %v989 = vpop.f32.mrf.mxu0
    %v990 = vadd.f32 0.0, %v989
    %991 = vmatmul.f32.gmra.mxu0 %v964
    %v992 = vpop.f32.mrf.mxu0
    %v993 = vadd.f32 0.0, %v992
    %994 = vmatmul.f32.gmra.mxu0 %v967
    %v995 = vpop.f32.mrf.mxu0
    %v996 = vadd.f32 0.0, %v995
    %997 = vdwg.mxu0
    %vm998 = vcmask 785408
    %v1000 = vsel %vm998, %v921, 0
    %v1003 = vsel %vm998, %v922, 0
    %v1006 = vsel %vm998, %v923, 0
    %v1009 = vsel %vm998, %v924, 0
    %1011 = vmatpush.msra.mxu0 0.0
    %1012 = vmatpush.msra.mxu0 0.0
    %1013 = vmatpush.msra.mxu0 0.0
    %1014 = vmatpush.msra.mxu0 0.0
    %1015 = vmatpush.msra.mxu0 %v948
    %1016 = vmatpush.msra.mxu0 %v946
    %1017 = vmatpush.msra.mxu0 %v944
    %1018 = vmatpush.msra.mxu0 %v942
    %1019 = vmatpush.msra.mxu0 %v920
    %1020 = vmatpush.msra.mxu0 %v919
    %1021 = vmatpush.msra.mxu0 %v918
    %1022 = vmatpush.msra.mxu0 %v917
    %1023 = vmatpush.msra.mxu0 %v936
    %1024 = vmatpush.msra.mxu0 %v934
    %1025 = vmatpush.msra.mxu0 %v932
    %1026 = vmatpush.msra.mxu0 %v930
    %1027 = vmatmul.f32.gmra.mxu0 %v1000
    %v1028 = vpop.f32.mrf.mxu0
    %v1029 = vadd.f32 %v987, %v1028
    %1030 = vmatmul.f32.gmra.mxu0 %v1003
    %v1031 = vpop.f32.mrf.mxu0
    %v1032 = vadd.f32 %v990, %v1031
    %1033 = vmatmul.f32.gmra.mxu0 %v1006
    %v1034 = vpop.f32.mrf.mxu0
    %v1035 = vadd.f32 %v993, %v1034
    %1036 = vmatmul.f32.gmra.mxu0 %v1009
    %v1037 = vpop.f32.mrf.mxu0
    %v1038 = vadd.f32 %v996, %v1037
    %1039 = vdwg.mxu0
    %v1040 = vld [vmem:[%s15] sm:$0xff]
    %v1041 = vld [vmem:[%s15 + $0x8] sm:$0xff]
    %v1042 = vld [vmem:[%s15 + $0x10] sm:$0xff]
    %v1043 = vld [vmem:[%s15 + $0x18] sm:$0xff]
    %1045 = vset.pattern.permute.xlu0 0
    %1046 = vperm.xlu0 %1045, %v1040
    %v1047 = vpop.permute.xlu0 %1046
    %1050 = vset.pattern.permute.xlu0 0
    %1051 = vperm.xlu0 %1050, %v1041
    %v1052 = vpop.permute.xlu0 %1051
    %1055 = vset.pattern.permute.xlu0 0
    %1056 = vperm.xlu0 %1055, %v1042
    %v1057 = vpop.permute.xlu0 %1056
    %1060 = vset.pattern.permute.xlu0 0
    %1061 = vperm.xlu0 %1060, %v1043
    %v1062 = vpop.permute.xlu0 %1061
    %v1064 = vadd.f32 %v1029, %v1047
    %v1065 = vadd.f32 %v1032, %v1052
    %v1066 = vadd.f32 %v1035, %v1057
    %v1067 = vadd.f32 %v1038, %v1062
    %1068 = vst [vmem:[#allocation2] sm:$0xff] %v1064
    %1069 = vst [vmem:[#allocation2 + $0x8] sm:$0xff] %v1065
    %1070 = vst [vmem:[#allocation2 + $0x10] sm:$0xff] %v1066
    %1071 = vst [vmem:[#allocation2 + $0x18] sm:$0xff] %v1067
    // Predicated region
    $region70: #{tpu_custom_call.1} parent=1 // pred_check
      _
    $region71: #{tpu_custom_call.1} parent=1 // pred_check_branch
      %1073 = sbr.rel (0) target = $region73
    $region72: #{tpu_custom_call.1} parent=1 // pred_region
      %1075 = vsyncadd [#allocation3], 0
      %s1076 = sshll.u32 [#allocation2], 4
      %s1077 = int_to_ptr.vmem [resolvable:$true] %s1076
      %s1078 = sshll.u32 %s17, 4
      %s1079 = int_to_ptr.hbm [resolvable:$true] %s1078
      %1084 = dma.vmem_to_hbm [thread:$0]  %s1077, 512, %s1079, [#allocation3], 128, 128, 8
    $region73: #{tpu_custom_call.1} parent=1 // pred_fallthru
      _
    // Predicated region
    $region74: #{tpu_custom_call.1} parent=1 // pred_check
      _
    $region75: #{tpu_custom_call.1} parent=1 // pred_check_branch
      %1086 = sbr.rel (0) target = $region77
    $region76: #{tpu_custom_call.1} parent=1 // pred_region
      %1088 = dma.done [#allocation3], 512
    $region77: #{tpu_custom_call.1} parent=1 // pred_fallthru
      _
    %1089 = vsyncpa [#allocation3], 1

</llo_original>
